<compile_context>
chip_gen: v7x
topology: tpu7x:2x2x1
jax: 0.10.0
libtpu: 0.0.40
codegen_flags: <defaults>
</compile_context>

<pallas_src>
import functools

import jax
import jax.numpy as jnp
from jax.experimental import pallas as pl
from jax.experimental.pallas import tpu as pltpu


def _round_up(x, m):
    return (x + m - 1) // m * m


# ----------------------------------------------------------------------------
# Fused Pallas kernel
# ----------------------------------------------------------------------------
def _ebm_mnist_kernel(x_ref, y_ref, w1_ref, b1_ref, emb_ref, w2_ref, b2_ref,
                      o_ref, *, num_classes):
    # ---- fc1: cast x tile to bf16 in VMEM, bf16 MXU, f32 accumulation ----
    h = jnp.dot(x_ref[...].astype(jnp.bfloat16), w1_ref[...],
                preferred_element_type=jnp.float32)
    h = jnp.maximum(h + b1_ref[...], 0.0)                       # ReLU_1

    # ---- embedding lookup as a gather-free one-hot matmul (MXU) ----
    # The table already holds F.normalize(E, dim=-1) + 1, so this directly
    # yields the modulation factor (n + 1); no in-kernel normalization.
    y = y_ref[...]                                               # (tm, 1) int32
    classes = jax.lax.broadcasted_iota(jnp.int32,
                                       (y.shape[0], num_classes), 1)
    onehot = (y == classes).astype(jnp.float32)                  # (tm, C)
    n_plus_1 = jnp.dot(onehot, emb_ref[...],
                       preferred_element_type=jnp.float32)       # (tm, Dp)

    # ---- z = relu(h*n + h) == h * (n + 1)  (ReLU_2 is an identity here) ----
    z = h * n_plus_1

    # ---- out = Linear(1000, 1): lane reduction, lane-dense (1, tm) store ----
    s = jnp.sum(z * w2_ref[...], axis=-1, keepdims=True)         # (tm, 1)
    o_ref[...] = jnp.transpose(s) + b2_ref[0]                    # (1, tm)


# ----------------------------------------------------------------------------
# Wrapper
# ----------------------------------------------------------------------------
def ebm_mnist_forward(x, y, params):
    """x: any shape with 784 trailing elements per sample; y: (B,) int labels."""
    B = x.shape[0]
    x_flat = x.reshape(B, 784).astype(jnp.float32)
    nc, Dp = params["embedding"].shape            # Dp = 1024 (padded hidden)
    K = x_flat.shape[1]

    # Batch tile:
    #   * B <= 128: one grid step, tile = 8-aligned batch (tm == Bp).
    #   * B  > 128: tm is a multiple of 128 (keeps the (1, tm) output block
    #     legal and lane-dense), capped at 512, targeting >= 4 grid steps so
    #     both v7x TensorCores get work via the "parallel" batch axis.
    if B <= 128:
        tm = _round_up(B, 8)
    else:
        tm = min(512, _round_up(pl.cdiv(B, 4), 128))
    Bp = _round_up(B, tm)
    if Bp != B:
        # Explicit zero pad: padded rows (x=0, y=0) produce harmless finite
        # values and are sliced off below.
        x_flat = jnp.pad(x_flat, ((0, Bp - B), (0, 0)))
        y = jnp.pad(y, ((0, Bp - B),))
    y2d = y.astype(jnp.int32).reshape(Bp, 1)

    kernel = functools.partial(_ebm_mnist_kernel, num_classes=nc)
    out = pl.pallas_call(
        kernel,
        out_shape=jax.ShapeDtypeStruct((1, Bp), jnp.float32),
        grid=(Bp // tm,),
        in_specs=[
            pl.BlockSpec((tm, K), lambda i: (i, 0)),     # x tile       (f32)
            pl.BlockSpec((tm, 1), lambda i: (i, 0)),     # labels       (int32)
            pl.BlockSpec((K, Dp), lambda i: (0, 0)),     # fc1 weight   (bf16, resident)
            pl.BlockSpec((1, Dp), lambda i: (0, 0)),     # fc1 bias     (f32)
            pl.BlockSpec((nc, Dp), lambda i: (0, 0)),    # norm.emb + 1 (f32)
            pl.BlockSpec((1, Dp), lambda i: (0, 0)),     # out weight^T (f32)
            pl.BlockSpec(memory_space=pltpu.MemorySpace.SMEM),  # out bias scalar
        ],
        out_specs=pl.BlockSpec((1, tm), lambda i: (0, i)),
        compiler_params=pltpu.CompilerParams(
            dimension_semantics=("parallel",),
            vmem_limit_bytes=32 * 1024 * 1024,
        ),
    )(x_flat, y2d, params["w1"], params["b1"], params["embedding"],
      params["w2"], params["b2"])
    return out.reshape(Bp, 1)[:B]


# ----------------------------------------------------------------------------
# Parameter prep (one-time, outside the kernel)
# ----------------------------------------------------------------------------
def prepare_params(w1, b1, emb, w2, b2, hidden_padded=1024):
    """Pre-normalize embedding (+1 folded in), zero-pad hidden dim, bf16 w1.

    Inputs use the pre-transposed layouts: w1 (784, D), b1 (D,), emb (C, D),
    w2 (1, D) [= nn.Linear(D,1).weight], b2 (1,).
    """
    D = w1.shape[1]
    pad = hidden_padded - D
    norm = jnp.sqrt(jnp.sum(emb * emb, axis=-1, keepdims=True))
    emb_mod = emb / jnp.maximum(norm, 1e-12) + 1.0       # F.normalize + folded '+ z'
    return {
        "w1": jnp.pad(w1, ((0, 0), (0, pad))).astype(jnp.bfloat16),
        "b1": jnp.pad(b1.reshape(1, D), ((0, 0), (0, pad))).astype(jnp.float32),
        "embedding": jnp.pad(emb_mod, ((0, 0), (0, pad))).astype(jnp.float32),
        "w2": jnp.pad(w2.reshape(1, D), ((0, 0), (0, pad))).astype(jnp.float32),
        "b2": b2.reshape(1).astype(jnp.float32),
    }


def init_params(num_classes=10, seed=0, hidden=1000):
    key = jax.random.PRNGKey(seed)
    k1, k2, k3, k4, k5 = jax.random.split(key, 5)
    w1 = jax.random.normal(k1, (784, hidden), jnp.float32) / jnp.sqrt(784.0)
    b1 = 0.01 * jax.random.normal(k2, (hidden,), jnp.float32)
    emb = jax.random.normal(k3, (num_classes, hidden), jnp.float32)
    w2 = jax.random.normal(k4, (1, hidden), jnp.float32) / jnp.sqrt(float(hidden))
    b2 = 0.01 * jax.random.normal(k5, (1,), jnp.float32)
    raw = {"w1": w1, "b1": b1, "embedding": emb, "w2": w2, "b2": b2}
    return raw, prepare_params(w1, b1, emb, w2, b2)


# ----------------------------------------------------------------------------
# Pure-JAX reference (follows the PyTorch formula exactly, f32)
# ----------------------------------------------------------------------------
def _reference_forward(x, y, raw):
    xf = x.reshape(x.shape[0], 784)
    z = jnp.maximum(xf @ raw["w1"] + raw["b1"], 0.0)
    e = raw["embedding"][y]
    n = e / jnp.maximum(jnp.linalg.norm(e, axis=-1, keepdims=True), 1e-12)
    z = jnp.maximum(z * n + z, 0.0)
    return z @ raw["w2"].T + raw["b2"]


if __name__ == "__main__":
    num_classes = 10
    batch = 2
    key = jax.random.PRNGKey(0)
    kx, ky = jax.random.split(key)
    x = jax.random.normal(kx, (batch, 1, 28, 28), jnp.float32)   # MNIST-shaped
    y = jax.random.randint(ky, (batch,), 0, num_classes)

    raw, params = init_params(num_classes=num_classes, seed=0)

    out = jax.block_until_ready(ebm_mnist_forward(x, y, params))
    assert out.shape == (batch, 1), out.shape
    assert bool(jnp.all(jnp.isfinite(out)))

    # Loose tolerance: fc1 runs in bf16 (deliberate numerics deviation).
    ref = _reference_forward(x, y, raw)
    rel_err = float(jnp.max(jnp.abs(out - ref)) /
                    jnp.maximum(jnp.max(jnp.abs(ref)), 0.5))
    assert rel_err < 5e-2, f"relative error too large: {rel_err}"
    print("KERNEL_OK")
</pallas_src>

<mosaic_0001>
module attributes {stable_mosaic.version = 11 : i64} {
  func.func @_ebm_mnist_kernel(%arg0: i32, %arg1: memref<8x784xf32, #tpu.memory_space<vmem>>, %arg2: memref<8x1xi32, #tpu.memory_space<vmem>>, %arg3: memref<784x1024xbf16, #tpu.memory_space<vmem>>, %arg4: memref<1x1024xf32, #tpu.memory_space<vmem>>, %arg5: memref<10x1024xf32, #tpu.memory_space<vmem>>, %arg6: memref<1x1024xf32, #tpu.memory_space<vmem>>, %arg7: memref<1xf32, #tpu.memory_space<smem>>, %arg8: memref<1x8xf32, #tpu.memory_space<vmem>>) attributes {dimension_semantics = [#tpu.dimension_semantics<parallel>], iteration_bounds = array<i64: 1>, scalar_prefetch = 0 : i64, scratch_operands = 0 : i64, tpu.core_type = #tpu.core_type<tc>, window_params = [{transform_indices = @transform_0, window_bounds = array<i64: 8, 784>}, {transform_indices = @transform_1, window_bounds = array<i64: 8, 1>}, {pipeline_mode = #tpu.pipeline_mode<synchronous>, transform_indices = @transform_2, window_bounds = array<i64: 784, 1024>}, {pipeline_mode = #tpu.pipeline_mode<synchronous>, transform_indices = @transform_3, window_bounds = array<i64: 1, 1024>}, {pipeline_mode = #tpu.pipeline_mode<synchronous>, transform_indices = @transform_4, window_bounds = array<i64: 10, 1024>}, {pipeline_mode = #tpu.pipeline_mode<synchronous>, transform_indices = @transform_5, window_bounds = array<i64: 1, 1024>}, {transform_indices = @transform_6, window_bounds = array<i64: 1>}, {transform_indices = @transform_7, window_bounds = array<i64: 1, 8>}]} {
    %c0 = arith.constant 0 : index
    %c0_0 = arith.constant 0 : index
    %0 = vector.load %arg1[%c0, %c0_0] : memref<8x784xf32, #tpu.memory_space<vmem>>, vector<8x784xf32>
    %1 = arith.truncf %0 : vector<8x784xf32> to vector<8x784xbf16>
    %c0_1 = arith.constant 0 : index
    %c0_2 = arith.constant 0 : index
    %2 = vector.load %arg3[%c0_1, %c0_2] : memref<784x1024xbf16, #tpu.memory_space<vmem>>, vector<784x1024xbf16>
    %cst = arith.constant dense<0.000000e+00> : vector<8x1024xf32>
    %3 = tpu.matmul %1, %2, %cst {dimension_numbers = #tpu.dot_dimension_numbers<[1], [0], [0], [1], [0, 0, 1, 1], [], []>} : vector<8x784xbf16>, vector<784x1024xbf16>, vector<8x1024xf32> -> vector<8x1024xf32>
    %c0_3 = arith.constant 0 : index
    %c0_4 = arith.constant 0 : index
    %4 = vector.load %arg4[%c0_3, %c0_4] : memref<1x1024xf32, #tpu.memory_space<vmem>>, vector<1x1024xf32>
    %5 = vector.broadcast %4 : vector<1x1024xf32> to vector<8x1024xf32>
    %6 = arith.addf %3, %5 : vector<8x1024xf32>
    %cst_5 = arith.constant 0.000000e+00 : f32
    %7 = vector.broadcast %cst_5 : f32 to vector<8x1024xf32>
    %8 = arith.maximumf %6, %7 : vector<8x1024xf32>
    %c0_6 = arith.constant 0 : index
    %c0_7 = arith.constant 0 : index
    %9 = vector.load %arg2[%c0_6, %c0_7] : memref<8x1xi32, #tpu.memory_space<vmem>>, vector<8x1xi32>
    %10 = tpu.iota {dimensions = array<i32: 1>} : vector<8x10xi32>
    %11 = vector.broadcast %9 : vector<8x1xi32> to vector<8x10xi32>
    %12 = arith.cmpi eq, %11, %10 : vector<8x10xi32>
    %13 = arith.extui %12 : vector<8x10xi1> to vector<8x10xi32>
    %14 = arith.sitofp %13 : vector<8x10xi32> to vector<8x10xf32>
    %c0_8 = arith.constant 0 : index
    %c0_9 = arith.constant 0 : index
    %15 = vector.load %arg5[%c0_8, %c0_9] : memref<10x1024xf32, #tpu.memory_space<vmem>>, vector<10x1024xf32>
    %cst_10 = arith.constant dense<0.000000e+00> : vector<8x1024xf32>
    %16 = tpu.matmul %14, %15, %cst_10 {dimension_numbers = #tpu.dot_dimension_numbers<[1], [0], [0], [1], [0, 0, 1, 1], [], []>} : vector<8x10xf32>, vector<10x1024xf32>, vector<8x1024xf32> -> vector<8x1024xf32>
    %17 = arith.mulf %8, %16 : vector<8x1024xf32>
    %c0_11 = arith.constant 0 : index
    %c0_12 = arith.constant 0 : index
    %18 = vector.load %arg6[%c0_11, %c0_12] : memref<1x1024xf32, #tpu.memory_space<vmem>>, vector<1x1024xf32>
    %19 = vector.broadcast %18 : vector<1x1024xf32> to vector<8x1024xf32>
    %20 = arith.mulf %17, %19 : vector<8x1024xf32>
    %cst_13 = arith.constant dense<0.000000e+00> : vector<8xf32>
    %21 = vector.multi_reduction <add>, %20, %cst_13 [1] : vector<8x1024xf32> to vector<8xf32>
    %22 = vector.shape_cast %21 : vector<8xf32> to vector<8x1xf32>
    %23 = tpu.transpose %22, [1, 0] : vector<8x1xf32> -> vector<1x8xf32>
    %c0_14 = arith.constant 0 : index
    %24 = memref.load %arg7[%c0_14] : memref<1xf32, #tpu.memory_space<smem>>
    %25 = vector.broadcast %24 : f32 to vector<1x8xf32>
    %26 = arith.addf %23, %25 : vector<1x8xf32>
    %c0_15 = arith.constant 0 : index
    %c0_16 = arith.constant 0 : index
    %27 = vector.load %arg8[%c0_15, %c0_16] : memref<1x8xf32, #tpu.memory_space<vmem>>, vector<1x8xf32>
    tpu.vector_store %arg8[%c0_15, %c0_16], %26 {strides = array<i32>} : memref<1x8xf32, #tpu.memory_space<vmem>>, vector<1x8xf32>,
    return
  }
  func.func @transform_0(%arg0: i32) -> (i32, i32) {
    %c0_i32 = arith.constant 0 : i32
    %c0_i32_0 = arith.constant 0 : i32
    return %arg0, %c0_i32 : i32, i32
  }
  func.func @transform_1(%arg0: i32) -> (i32, i32) {
    %c0_i32 = arith.constant 0 : i32
    %c0_i32_0 = arith.constant 0 : i32
    return %arg0, %c0_i32 : i32, i32
  }
  func.func @transform_2(%arg0: i32) -> (i32, i32) {
    %c0_i32 = arith.constant 0 : i32
    %c0_i32_0 = arith.constant 0 : i32
    %c0_i32_1 = arith.constant 0 : i32
    return %c0_i32, %c0_i32_0 : i32, i32
  }
  func.func @transform_3(%arg0: i32) -> (i32, i32) {
    %c0_i32 = arith.constant 0 : i32
    %c0_i32_0 = arith.constant 0 : i32
    %c0_i32_1 = arith.constant 0 : i32
    return %c0_i32, %c0_i32_0 : i32, i32
  }
  func.func @transform_4(%arg0: i32) -> (i32, i32) {
    %c0_i32 = arith.constant 0 : i32
    %c0_i32_0 = arith.constant 0 : i32
    %c0_i32_1 = arith.constant 0 : i32
    return %c0_i32, %c0_i32_0 : i32, i32
  }
  func.func @transform_5(%arg0: i32) -> (i32, i32) {
    %c0_i32 = arith.constant 0 : i32
    %c0_i32_0 = arith.constant 0 : i32
    %c0_i32_1 = arith.constant 0 : i32
    return %c0_i32, %c0_i32_0 : i32, i32
  }
  func.func @transform_6(%arg0: i32) -> i32 {
    %c0_i32 = arith.constant 0 : i32
    %c0_i32_0 = arith.constant 0 : i32
    return %c0_i32 : i32
  }
  func.func @transform_7(%arg0: i32) -> (i32, i32) {
    %c0_i32 = arith.constant 0 : i32
    %c0_i32_0 = arith.constant 0 : i32
    return %c0_i32, %arg0 : i32, i32
  }
}

</mosaic_0001>

<llo_original>
// kernel: tpu_custom_call.1
$region0: #{tpu_custom_call.1}
  #allocation0 [shape = 'u32[]', space=smem, size = 0x4, offset = 0x4, fixed_abs, tag = 'smem constant byte address 0x4 - core index']
  #allocation1 [shape = 'u32[144,128]{1,0:T(1,128)}', space=vmem, size = 0x12000, scoped, tag = 'internal scratch']
  #allocation2 [shape = 'f32[1]{0:T(128)S(6)}', space=smem, size = 0x200, scoped, tag = 'scoped memory for tpu_custom_call.1']
  %s0 = inlined_call_operand.hbm [shape: f32[8,784], index: 0, kind: input, shape index: {}]
  %s1 = inlined_call_operand.vmem [shape: s32[8,1], index: 1, kind: input, shape index: {}]
  %s2 = inlined_call_operand.hbm [shape: bf16[784,1024], index: 2, kind: input, shape index: {}]
  %s3 = inlined_call_operand.hbm [shape: f32[1,1024], index: 3, kind: input, shape index: {}]
  %s4 = inlined_call_operand.hbm [shape: f32[10,1024], index: 4, kind: input, shape index: {}]
  %s5 = inlined_call_operand.hbm [shape: f32[1,1024], index: 5, kind: input, shape index: {}]
  %s6 = inlined_call_operand.<no memory space> [shape: f32[1], index: 6, kind: input, shape index: {}]
  %s7 = inlined_call_operand.hbm [shape: f32[1,8], index: 7, kind: output, shape index: {}]
  %s8 = sld [smem:[#allocation0]]
  $region58: #{tpu_custom_call.1} parent=0
    _
  %s10 = ssub.s32 1, %s8
  %s11 = scalar_select 0, %s10, %s8
  %12 = sst [smem:[#allocation2]] %s6
  $region1: #{tpu_custom_call.1} parent=0
    #allocation3 [shape = 'u8[28672]{0}', space=vmem, size = 0x7000, scoped, tag = 'input window, operand 0, single buffered']
    #allocation4 [shape = 's32[1]{0}', space=sflag, size = 0x4, scoped, tag = 'scoped memory for tpu_custom_call.1']
    #allocation5 [shape = 's32[1]{0}', space=sflag, size = 0x4, scoped, tag = 'scoped memory for tpu_custom_call.1']
    #allocation6 [shape = 'u8[1605632]{0}', space=vmem, size = 0x188000, scoped, tag = 'input window, operand 2, single buffered']
    #allocation7 [shape = 's32[1]{0}', space=sflag, size = 0x4, scoped, tag = 'scoped memory for tpu_custom_call.1']
    #allocation8 [shape = 'u8[4096]{0}', space=vmem, size = 0x1000, scoped, tag = 'input window, operand 3, single buffered']
    #allocation9 [shape = 'u8[65536]{0}', space=vmem, size = 0x10000, scoped, tag = 'input window, operand 4, single buffered']
    #allocation10 [shape = 's32[1]{0}', space=sflag, size = 0x4, scoped, tag = 'scoped memory for tpu_custom_call.1']
    #allocation11 [shape = 'u8[4096]{0}', space=vmem, size = 0x1000, scoped, tag = 'input window, operand 5, single buffered']
    #allocation12 [shape = 'u8[512]{0}', space=vmem, size = 0x400, scoped, tag = 'output window, operand 0, single buffered']
    %13 = vsyncpa [#allocation4], 0
    %14 = vsyncpa [#allocation7], 0
    %15 = vsyncpa [#allocation10], 0
    %16 = vsyncpa [#allocation5], 0
    // Predicated region
    $region2: #{tpu_custom_call.1} parent=1 // pred_check
      _
    $region3: #{tpu_custom_call.1} parent=1 // pred_check_branch
      %18 = sbr.rel (0) target = $region5
    $region4: #{tpu_custom_call.1} parent=1 // pred_region
      %s20 = ssub.s32 896, 896
      %21 = vsyncadd [#allocation4], %s20
      %s23 = sshll.u32 [#allocation3], 4
      %s24 = int_to_ptr.vmem [resolvable:$true] %s23
      %26 = dma.hbm_to_vmem [thread:$0]  %s0, 896, %s24, [#allocation4]
    $region5: #{tpu_custom_call.1} parent=1 // pred_fallthru
      _
    // Predicated region
    $region6: #{tpu_custom_call.1} parent=1 // pred_check
      _
    $region7: #{tpu_custom_call.1} parent=1 // pred_check_branch
      %28 = sbr.rel (0) target = $region9
    $region8: #{tpu_custom_call.1} parent=1 // pred_region
      _
    $region9: #{tpu_custom_call.1} parent=1 // pred_fallthru
      _
    // Predicated region
    $region10: #{tpu_custom_call.1} parent=1 // pred_check
      _
    $region11: #{tpu_custom_call.1} parent=1 // pred_check_branch
      %30 = sbr.rel (0) target = $region13
    $region12: #{tpu_custom_call.1} parent=1 // pred_region
      %s32 = ssub.s32 50176, 50176
      %33 = vsyncadd [#allocation7], %s32
      %s34 = sshll.u32 [#allocation6], 4
      %s35 = int_to_ptr.vmem [resolvable:$true] %s34
      %40 = dma.hbm_to_vmem [thread:$0]  %s2, 50176, %s35, [#allocation7], 512, 512, 32
    $region13: #{tpu_custom_call.1} parent=1 // pred_fallthru
      _
    // Predicated region
    $region14: #{tpu_custom_call.1} parent=1 // pred_check
      _
    $region15: #{tpu_custom_call.1} parent=1 // pred_check_branch
      %42 = sbr.rel (0) target = $region17
    $region16: #{tpu_custom_call.1} parent=1 // pred_region
      %s44 = ssub.s32 128, 128
      %45 = vsyncadd [#allocation7], %s44
      %s47 = sshll.u32 [#allocation8], 4
      %s48 = int_to_ptr.vmem [resolvable:$true] %s47
      %50 = dma.hbm_to_vmem [thread:$0]  %s3, 128, %s48, [#allocation7]
    $region17: #{tpu_custom_call.1} parent=1 // pred_fallthru
      _
    // Predicated region
    $region18: #{tpu_custom_call.1} parent=1 // pred_check
      _
    $region19: #{tpu_custom_call.1} parent=1 // pred_check_branch
      %52 = sbr.rel (0) target = $region21
    $region20: #{tpu_custom_call.1} parent=1 // pred_region
      %s54 = ssub.s32 2048, 2048
      %55 = vsyncadd [#allocation10], %s54
      %s56 = sshll.u32 [#allocation9], 4
      %s57 = int_to_ptr.vmem [resolvable:$true] %s56
      %62 = dma.hbm_to_vmem [thread:$0]  %s4, 2048, %s57, [#allocation10], 1024, 1024, 64
    $region21: #{tpu_custom_call.1} parent=1 // pred_fallthru
      _
    // Predicated region
    $region22: #{tpu_custom_call.1} parent=1 // pred_check
      _
    $region23: #{tpu_custom_call.1} parent=1 // pred_check_branch
      %64 = sbr.rel (0) target = $region25
    $region24: #{tpu_custom_call.1} parent=1 // pred_region
      %s66 = ssub.s32 128, 128
      %67 = vsyncadd [#allocation10], %s66
      %s69 = sshll.u32 [#allocation11], 4
      %s70 = int_to_ptr.vmem [resolvable:$true] %s69
      %72 = dma.hbm_to_vmem [thread:$0]  %s5, 128, %s70, [#allocation10]
    $region25: #{tpu_custom_call.1} parent=1 // pred_fallthru
      _
    // Predicated region
    $region26: #{tpu_custom_call.1} parent=1 // pred_check
      _
    $region27: #{tpu_custom_call.1} parent=1 // pred_check_branch
      %74 = sbr.rel (0) target = $region29
    $region28: #{tpu_custom_call.1} parent=1 // pred_region
      _
    $region29: #{tpu_custom_call.1} parent=1 // pred_fallthru
      _
    // Predicated region
    $region30: #{tpu_custom_call.1} parent=1 // pred_check
      _
    $region31: #{tpu_custom_call.1} parent=1 // pred_check_branch
      %76 = sbr.rel (0) target = $region33
    $region32: #{tpu_custom_call.1} parent=1 // pred_region
      %77 = dma.done [#allocation4], 896
    $region33: #{tpu_custom_call.1} parent=1 // pred_fallthru
      _
    // Predicated region
    $region34: #{tpu_custom_call.1} parent=1 // pred_check
      _
    $region35: #{tpu_custom_call.1} parent=1 // pred_check_branch
      %79 = sbr.rel (0) target = $region37
    $region36: #{tpu_custom_call.1} parent=1 // pred_region
      %80 = dma.done [#allocation7], 50176
    $region37: #{tpu_custom_call.1} parent=1 // pred_fallthru
      _
    // Predicated region
    $region38: #{tpu_custom_call.1} parent=1 // pred_check
      _
    $region39: #{tpu_custom_call.1} parent=1 // pred_check_branch
      %82 = sbr.rel (0) target = $region41
    $region40: #{tpu_custom_call.1} parent=1 // pred_region
      %83 = dma.done [#allocation7], 128
    $region41: #{tpu_custom_call.1} parent=1 // pred_fallthru
      _
    // Predicated region
    $region42: #{tpu_custom_call.1} parent=1 // pred_check
      _
    $region43: #{tpu_custom_call.1} parent=1 // pred_check_branch
      %85 = sbr.rel (0) target = $region45
    $region44: #{tpu_custom_call.1} parent=1 // pred_region
      %86 = dma.done [#allocation10], 2048
    $region45: #{tpu_custom_call.1} parent=1 // pred_fallthru
      _
    // Predicated region
    $region46: #{tpu_custom_call.1} parent=1 // pred_check
      _
    $region47: #{tpu_custom_call.1} parent=1 // pred_check_branch
      %88 = sbr.rel (0) target = $region49
    $region48: #{tpu_custom_call.1} parent=1 // pred_region
      %89 = dma.done [#allocation10], 128
    $region49: #{tpu_custom_call.1} parent=1 // pred_fallthru
      _
    %v91 = vld [vmem:[#allocation3] sm:$0xff]
    %v92 = vld [vmem:[#allocation3 + $0x8] sm:$0xff]
    %v93 = vld [vmem:[#allocation3 + $0x10] sm:$0xff]
    %v94 = vld [vmem:[#allocation3 + $0x18] sm:$0xff]
    %v95 = vld [vmem:[#allocation3 + $0x20] sm:$0xff]
    %v96 = vld [vmem:[#allocation3 + $0x28] sm:$0xff]
    %v97 = vld [vmem:[#allocation3 + $0x30] sm:$0xff]
    %v98 = vpack.c.bf16 %v91, %v91
    %v99 = vpack.c.bf16 %v92, %v92
    %v100 = vpack.c.bf16 %v93, %v93
    %v101 = vpack.c.bf16 %v94, %v94
    %v102 = vpack.c.bf16 %v95, %v95
    %v103 = vpack.c.bf16 %v96, %v96
    %v104 = vpack.c.bf16 %v97, %v97
    %v105 = vld [vmem:[#allocation6] sm:$0xff]
    %v106 = vld [vmem:[#allocation6 + $0x8] sm:$0xff]
    %v107 = vld [vmem:[#allocation6 + $0x10] sm:$0xff]
    %v108 = vld [vmem:[#allocation6 + $0x18] sm:$0xff]
    %v109 = vld [vmem:[#allocation6 + $0x20] sm:$0xff]
    %v110 = vld [vmem:[#allocation6 + $0x28] sm:$0xff]
    %v111 = vld [vmem:[#allocation6 + $0x30] sm:$0xff]
    %v112 = vld [vmem:[#allocation6 + $0x38] sm:$0xff]
    %v113 = vld [vmem:[#allocation6 + $0x40] sm:$0xff]
    %v114 = vld [vmem:[#allocation6 + $0x48] sm:$0xff]
    %v115 = vld [vmem:[#allocation6 + $0x50] sm:$0xff]
    %v116 = vld [vmem:[#allocation6 + $0x58] sm:$0xff]
    %v117 = vld [vmem:[#allocation6 + $0x60] sm:$0xff]
    %v118 = vld [vmem:[#allocation6 + $0x68] sm:$0xff]
    %v119 = vld [vmem:[#allocation6 + $0x70] sm:$0xff]
    %v120 = vld [vmem:[#allocation6 + $0x78] sm:$0xff]
    %v121 = vld [vmem:[#allocation6 + $0x80] sm:$0xff]
    %v122 = vld [vmem:[#allocation6 + $0x88] sm:$0xff]
    %v123 = vld [vmem:[#allocation6 + $0x90] sm:$0xff]
    %v124 = vld [vmem:[#allocation6 + $0x98] sm:$0xff]
    %v125 = vld [vmem:[#allocation6 + $0xa0] sm:$0xff]
    %v126 = vld [vmem:[#allocation6 + $0xa8] sm:$0xff]
    %v127 = vld [vmem:[#allocation6 + $0xb0] sm:$0xff]
    %v128 = vld [vmem:[#allocation6 + $0xb8] sm:$0xff]
    %v129 = vld [vmem:[#allocation6 + $0xc0] sm:$0xff]
    %v130 = vld [vmem:[#allocation6 + $0xc8] sm:$0xff]
    %v131 = vld [vmem:[#allocation6 + $0xd0] sm:$0xff]
    %v132 = vld [vmem:[#allocation6 + $0xd8] sm:$0xff]
    %v133 = vld [vmem:[#allocation6 + $0xe0] sm:$0xff]
    %v134 = vld [vmem:[#allocation6 + $0xe8] sm:$0xff]
    %v135 = vld [vmem:[#allocation6 + $0xf0] sm:$0xff]
    %v136 = vld [vmem:[#allocation6 + $0xf8] sm:$0xff]
    %v137 = vld [vmem:[#allocation6 + $0x100] sm:$0xff]
    %v138 = vld [vmem:[#allocation6 + $0x108] sm:$0xff]
    %v139 = vld [vmem:[#allocation6 + $0x110] sm:$0xff]
    %v140 = vld [vmem:[#allocation6 + $0x118] sm:$0xff]
    %v141 = vld [vmem:[#allocation6 + $0x120] sm:$0xff]
    %v142 = vld [vmem:[#allocation6 + $0x128] sm:$0xff]
    %v143 = vld [vmem:[#allocation6 + $0x130] sm:$0xff]
    %v144 = vld [vmem:[#allocation6 + $0x138] sm:$0xff]
    %v145 = vld [vmem:[#allocation6 + $0x140] sm:$0xff]
    %v146 = vld [vmem:[#allocation6 + $0x148] sm:$0xff]
    %v147 = vld [vmem:[#allocation6 + $0x150] sm:$0xff]
    %v148 = vld [vmem:[#allocation6 + $0x158] sm:$0xff]
    %v149 = vld [vmem:[#allocation6 + $0x160] sm:$0xff]
    %v150 = vld [vmem:[#allocation6 + $0x168] sm:$0xff]
    %v151 = vld [vmem:[#allocation6 + $0x170] sm:$0xff]
    %v152 = vld [vmem:[#allocation6 + $0x178] sm:$0xff]
    %v153 = vld [vmem:[#allocation6 + $0x180] sm:$0xff]
    %v154 = vld [vmem:[#allocation6 + $0x188] sm:$0xff]
    %v155 = vld [vmem:[#allocation6 + $0x190] sm:$0xff]
    %v156 = vld [vmem:[#allocation6 + $0x198] sm:$0xff]
    %v157 = vld [vmem:[#allocation6 + $0x1a0] sm:$0xff]
    %v158 = vld [vmem:[#allocation6 + $0x1a8] sm:$0xff]
    %v159 = vld [vmem:[#allocation6 + $0x1b0] sm:$0xff]
    %v160 = vld [vmem:[#allocation6 + $0x1b8] sm:$0xff]
    %v161 = vld [vmem:[#allocation6 + $0x1c0] sm:$0xff]
    %v162 = vld [vmem:[#allocation6 + $0x1c8] sm:$0xff]
    %v163 = vld [vmem:[#allocation6 + $0x1d0] sm:$0xff]
    %v164 = vld [vmem:[#allocation6 + $0x1d8] sm:$0xff]
    %v165 = vld [vmem:[#allocation6 + $0x1e0] sm:$0xff]
    %v166 = vld [vmem:[#allocation6 + $0x1e8] sm:$0xff]
    %v167 = vld [vmem:[#allocation6 + $0x1f0] sm:$0xff]
    %v168 = vld [vmem:[#allocation6 + $0x1f8] sm:$0xff]
    %v169 = vld [vmem:[#allocation6 + $0x200] sm:$0xff]
    %v170 = vld [vmem:[#allocation6 + $0x208] sm:$0xff]
    %v171 = vld [vmem:[#allocation6 + $0x210] sm:$0xff]
    %v172 = vld [vmem:[#allocation6 + $0x218] sm:$0xff]
    %v173 = vld [vmem:[#allocation6 + $0x220] sm:$0xff]
    %v174 = vld [vmem:[#allocation6 + $0x228] sm:$0xff]
    %v175 = vld [vmem:[#allocation6 + $0x230] sm:$0xff]
    %v176 = vld [vmem:[#allocation6 + $0x238] sm:$0xff]
    %v177 = vld [vmem:[#allocation6 + $0x240] sm:$0xff]
    %v178 = vld [vmem:[#allocation6 + $0x248] sm:$0xff]
    %v179 = vld [vmem:[#allocation6 + $0x250] sm:$0xff]
    %v180 = vld [vmem:[#allocation6 + $0x258] sm:$0xff]
    %v181 = vld [vmem:[#allocation6 + $0x260] sm:$0xff]
    %v182 = vld [vmem:[#allocation6 + $0x268] sm:$0xff]
    %v183 = vld [vmem:[#allocation6 + $0x270] sm:$0xff]
    %v184 = vld [vmem:[#allocation6 + $0x278] sm:$0xff]
    %v185 = vld [vmem:[#allocation6 + $0x280] sm:$0xff]
    %v186 = vld [vmem:[#allocation6 + $0x288] sm:$0xff]
    %v187 = vld [vmem:[#allocation6 + $0x290] sm:$0xff]
    %v188 = vld [vmem:[#allocation6 + $0x298] sm:$0xff]
    %v189 = vld [vmem:[#allocation6 + $0x2a0] sm:$0xff]
    %v190 = vld [vmem:[#allocation6 + $0x2a8] sm:$0xff]
    %v191 = vld [vmem:[#allocation6 + $0x2b0] sm:$0xff]
    %v192 = vld [vmem:[#allocation6 + $0x2b8] sm:$0xff]
    %v193 = vld [vmem:[#allocation6 + $0x2c0] sm:$0xff]
    %v194 = vld [vmem:[#allocation6 + $0x2c8] sm:$0xff]
    %v195 = vld [vmem:[#allocation6 + $0x2d0] sm:$0xff]
    %v196 = vld [vmem:[#allocation6 + $0x2d8] sm:$0xff]
    %v197 = vld [vmem:[#allocation6 + $0x2e0] sm:$0xff]
    %v198 = vld [vmem:[#allocation6 + $0x2e8] sm:$0xff]
    %v199 = vld [vmem:[#allocation6 + $0x2f0] sm:$0xff]
    %v200 = vld [vmem:[#allocation6 + $0x2f8] sm:$0xff]
    %v201 = vld [vmem:[#allocation6 + $0x300] sm:$0xff]
    %v202 = vld [vmem:[#allocation6 + $0x308] sm:$0xff]
    %v203 = vld [vmem:[#allocation6 + $0x310] sm:$0xff]
    %v204 = vld [vmem:[#allocation6 + $0x318] sm:$0xff]
    %v205 = vld [vmem:[#allocation6 + $0x320] sm:$0xff]
    %v206 = vld [vmem:[#allocation6 + $0x328] sm:$0xff]
    %v207 = vld [vmem:[#allocation6 + $0x330] sm:$0xff]
    %v208 = vld [vmem:[#allocation6 + $0x338] sm:$0xff]
    %v209 = vld [vmem:[#allocation6 + $0x340] sm:$0xff]
    %v210 = vld [vmem:[#allocation6 + $0x348] sm:$0xff]
    %v211 = vld [vmem:[#allocation6 + $0x350] sm:$0xff]
    %v212 = vld [vmem:[#allocation6 + $0x358] sm:$0xff]
    %v213 = vld [vmem:[#allocation6 + $0x360] sm:$0xff]
    %v214 = vld [vmem:[#allocation6 + $0x368] sm:$0xff]
    %v215 = vld [vmem:[#allocation6 + $0x370] sm:$0xff]
    %v216 = vld [vmem:[#allocation6 + $0x378] sm:$0xff]
    %v217 = vld [vmem:[#allocation6 + $0x380] sm:$0xff]
    %v218 = vld [vmem:[#allocation6 + $0x388] sm:$0xff]
    %v219 = vld [vmem:[#allocation6 + $0x390] sm:$0xff]
    %v220 = vld [vmem:[#allocation6 + $0x398] sm:$0xff]
    %v221 = vld [vmem:[#allocation6 + $0x3a0] sm:$0xff]
    %v222 = vld [vmem:[#allocation6 + $0x3a8] sm:$0xff]
    %v223 = vld [vmem:[#allocation6 + $0x3b0] sm:$0xff]
    %v224 = vld [vmem:[#allocation6 + $0x3b8] sm:$0xff]
    %v225 = vld [vmem:[#allocation6 + $0x3c0] sm:$0xff]
    %v226 = vld [vmem:[#allocation6 + $0x3c8] sm:$0xff]
    %v227 = vld [vmem:[#allocation6 + $0x3d0] sm:$0xff]
    %v228 = vld [vmem:[#allocation6 + $0x3d8] sm:$0xff]
    %v229 = vld [vmem:[#allocation6 + $0x3e0] sm:$0xff]
    %v230 = vld [vmem:[#allocation6 + $0x3e8] sm:$0xff]
    %v231 = vld [vmem:[#allocation6 + $0x3f0] sm:$0xff]
    %v232 = vld [vmem:[#allocation6 + $0x3f8] sm:$0xff]
    %v233 = vld [vmem:[#allocation6 + $0x400] sm:$0xff]
    %v234 = vld [vmem:[#allocation6 + $0x408] sm:$0xff]
    %v235 = vld [vmem:[#allocation6 + $0x410] sm:$0xff]
    %v236 = vld [vmem:[#allocation6 + $0x418] sm:$0xff]
    %v237 = vld [vmem:[#allocation6 + $0x420] sm:$0xff]
    %v238 = vld [vmem:[#allocation6 + $0x428] sm:$0xff]
    %v239 = vld [vmem:[#allocation6 + $0x430] sm:$0xff]
    %v240 = vld [vmem:[#allocation6 + $0x438] sm:$0xff]
    %v241 = vld [vmem:[#allocation6 + $0x440] sm:$0xff]
    %v242 = vld [vmem:[#allocation6 + $0x448] sm:$0xff]
    %v243 = vld [vmem:[#allocation6 + $0x450] sm:$0xff]
    %v244 = vld [vmem:[#allocation6 + $0x458] sm:$0xff]
    %v245 = vld [vmem:[#allocation6 + $0x460] sm:$0xff]
    %v246 = vld [vmem:[#allocation6 + $0x468] sm:$0xff]
    %v247 = vld [vmem:[#allocation6 + $0x470] sm:$0xff]
    %v248 = vld [vmem:[#allocation6 + $0x478] sm:$0xff]
    %v249 = vld [vmem:[#allocation6 + $0x480] sm:$0xff]
    %v250 = vld [vmem:[#allocation6 + $0x488] sm:$0xff]
    %v251 = vld [vmem:[#allocation6 + $0x490] sm:$0xff]
    %v252 = vld [vmem:[#allocation6 + $0x498] sm:$0xff]
    %v253 = vld [vmem:[#allocation6 + $0x4a0] sm:$0xff]
    %v254 = vld [vmem:[#allocation6 + $0x4a8] sm:$0xff]
    %v255 = vld [vmem:[#allocation6 + $0x4b0] sm:$0xff]
    %v256 = vld [vmem:[#allocation6 + $0x4b8] sm:$0xff]
    %v257 = vld [vmem:[#allocation6 + $0x4c0] sm:$0xff]
    %v258 = vld [vmem:[#allocation6 + $0x4c8] sm:$0xff]
    %v259 = vld [vmem:[#allocation6 + $0x4d0] sm:$0xff]
    %v260 = vld [vmem:[#allocation6 + $0x4d8] sm:$0xff]
    %v261 = vld [vmem:[#allocation6 + $0x4e0] sm:$0xff]
    %v262 = vld [vmem:[#allocation6 + $0x4e8] sm:$0xff]
    %v263 = vld [vmem:[#allocation6 + $0x4f0] sm:$0xff]
    %v264 = vld [vmem:[#allocation6 + $0x4f8] sm:$0xff]
    %v265 = vld [vmem:[#allocation6 + $0x500] sm:$0xff]
    %v266 = vld [vmem:[#allocation6 + $0x508] sm:$0xff]
    %v267 = vld [vmem:[#allocation6 + $0x510] sm:$0xff]
    %v268 = vld [vmem:[#allocation6 + $0x518] sm:$0xff]
    %v269 = vld [vmem:[#allocation6 + $0x520] sm:$0xff]
    %v270 = vld [vmem:[#allocation6 + $0x528] sm:$0xff]
    %v271 = vld [vmem:[#allocation6 + $0x530] sm:$0xff]
    %v272 = vld [vmem:[#allocation6 + $0x538] sm:$0xff]
    %v273 = vld [vmem:[#allocation6 + $0x540] sm:$0xff]
    %v274 = vld [vmem:[#allocation6 + $0x548] sm:$0xff]
    %v275 = vld [vmem:[#allocation6 + $0x550] sm:$0xff]
    %v276 = vld [vmem:[#allocation6 + $0x558] sm:$0xff]
    %v277 = vld [vmem:[#allocation6 + $0x560] sm:$0xff]
    %v278 = vld [vmem:[#allocation6 + $0x568] sm:$0xff]
    %v279 = vld [vmem:[#allocation6 + $0x570] sm:$0xff]
    %v280 = vld [vmem:[#allocation6 + $0x578] sm:$0xff]
    %v281 = vld [vmem:[#allocation6 + $0x580] sm:$0xff]
    %v282 = vld [vmem:[#allocation6 + $0x588] sm:$0xff]
    %v283 = vld [vmem:[#allocation6 + $0x590] sm:$0xff]
    %v284 = vld [vmem:[#allocation6 + $0x598] sm:$0xff]
    %v285 = vld [vmem:[#allocation6 + $0x5a0] sm:$0xff]
    %v286 = vld [vmem:[#allocation6 + $0x5a8] sm:$0xff]
    %v287 = vld [vmem:[#allocation6 + $0x5b0] sm:$0xff]
    %v288 = vld [vmem:[#allocation6 + $0x5b8] sm:$0xff]
    %v289 = vld [vmem:[#allocation6 + $0x5c0] sm:$0xff]
    %v290 = vld [vmem:[#allocation6 + $0x5c8] sm:$0xff]
    %v291 = vld [vmem:[#allocation6 + $0x5d0] sm:$0xff]
    %v292 = vld [vmem:[#allocation6 + $0x5d8] sm:$0xff]
    %v293 = vld [vmem:[#allocation6 + $0x5e0] sm:$0xff]
    %v294 = vld [vmem:[#allocation6 + $0x5e8] sm:$0xff]
    %v295 = vld [vmem:[#allocation6 + $0x5f0] sm:$0xff]
    %v296 = vld [vmem:[#allocation6 + $0x5f8] sm:$0xff]
    %v297 = vld [vmem:[#allocation6 + $0x600] sm:$0xff]
    %v298 = vld [vmem:[#allocation6 + $0x608] sm:$0xff]
    %v299 = vld [vmem:[#allocation6 + $0x610] sm:$0xff]
    %v300 = vld [vmem:[#allocation6 + $0x618] sm:$0xff]
    %v301 = vld [vmem:[#allocation6 + $0x620] sm:$0xff]
    %v302 = vld [vmem:[#allocation6 + $0x628] sm:$0xff]
    %v303 = vld [vmem:[#allocation6 + $0x630] sm:$0xff]
    %v304 = vld [vmem:[#allocation6 + $0x638] sm:$0xff]
    %v305 = vld [vmem:[#allocation6 + $0x640] sm:$0xff]
    %v306 = vld [vmem:[#allocation6 + $0x648] sm:$0xff]
    %v307 = vld [vmem:[#allocation6 + $0x650] sm:$0xff]
    %v308 = vld [vmem:[#allocation6 + $0x658] sm:$0xff]
    %v309 = vld [vmem:[#allocation6 + $0x660] sm:$0xff]
    %v310 = vld [vmem:[#allocation6 + $0x668] sm:$0xff]
    %v311 = vld [vmem:[#allocation6 + $0x670] sm:$0xff]
    %v312 = vld [vmem:[#allocation6 + $0x678] sm:$0xff]
    %v313 = vld [vmem:[#allocation6 + $0x680] sm:$0xff]
    %v314 = vld [vmem:[#allocation6 + $0x688] sm:$0xff]
    %v315 = vld [vmem:[#allocation6 + $0x690] sm:$0xff]
    %v316 = vld [vmem:[#allocation6 + $0x698] sm:$0xff]
    %v317 = vld [vmem:[#allocation6 + $0x6a0] sm:$0xff]
    %v318 = vld [vmem:[#allocation6 + $0x6a8] sm:$0xff]
    %v319 = vld [vmem:[#allocation6 + $0x6b0] sm:$0xff]
    %v320 = vld [vmem:[#allocation6 + $0x6b8] sm:$0xff]
    %v321 = vld [vmem:[#allocation6 + $0x6c0] sm:$0xff]
    %v322 = vld [vmem:[#allocation6 + $0x6c8] sm:$0xff]
    %v323 = vld [vmem:[#allocation6 + $0x6d0] sm:$0xff]
    %v324 = vld [vmem:[#allocation6 + $0x6d8] sm:$0xff]
    %v325 = vld [vmem:[#allocation6 + $0x6e0] sm:$0xff]
    %v326 = vld [vmem:[#allocation6 + $0x6e8] sm:$0xff]
    %v327 = vld [vmem:[#allocation6 + $0x6f0] sm:$0xff]
    %v328 = vld [vmem:[#allocation6 + $0x6f8] sm:$0xff]
    %v329 = vld [vmem:[#allocation6 + $0x700] sm:$0xff]
    %v330 = vld [vmem:[#allocation6 + $0x708] sm:$0xff]
    %v331 = vld [vmem:[#allocation6 + $0x710] sm:$0xff]
    %v332 = vld [vmem:[#allocation6 + $0x718] sm:$0xff]
    %v333 = vld [vmem:[#allocation6 + $0x720] sm:$0xff]
    %v334 = vld [vmem:[#allocation6 + $0x728] sm:$0xff]
    %v335 = vld [vmem:[#allocation6 + $0x730] sm:$0xff]
    %v336 = vld [vmem:[#allocation6 + $0x738] sm:$0xff]
    %v337 = vld [vmem:[#allocation6 + $0x740] sm:$0xff]
    %v338 = vld [vmem:[#allocation6 + $0x748] sm:$0xff]
    %v339 = vld [vmem:[#allocation6 + $0x750] sm:$0xff]
    %v340 = vld [vmem:[#allocation6 + $0x758] sm:$0xff]
    %v341 = vld [vmem:[#allocation6 + $0x760] sm:$0xff]
    %v342 = vld [vmem:[#allocation6 + $0x768] sm:$0xff]
    %v343 = vld [vmem:[#allocation6 + $0x770] sm:$0xff]
    %v344 = vld [vmem:[#allocation6 + $0x778] sm:$0xff]
    %v345 = vld [vmem:[#allocation6 + $0x780] sm:$0xff]
    %v346 = vld [vmem:[#allocation6 + $0x788] sm:$0xff]
    %v347 = vld [vmem:[#allocation6 + $0x790] sm:$0xff]
    %v348 = vld [vmem:[#allocation6 + $0x798] sm:$0xff]
    %v349 = vld [vmem:[#allocation6 + $0x7a0] sm:$0xff]
    %v350 = vld [vmem:[#allocation6 + $0x7a8] sm:$0xff]
    %v351 = vld [vmem:[#allocation6 + $0x7b0] sm:$0xff]
    %v352 = vld [vmem:[#allocation6 + $0x7b8] sm:$0xff]
    %v353 = vld [vmem:[#allocation6 + $0x7c0] sm:$0xff]
    %v354 = vld [vmem:[#allocation6 + $0x7c8] sm:$0xff]
    %v355 = vld [vmem:[#allocation6 + $0x7d0] sm:$0xff]
    %v356 = vld [vmem:[#allocation6 + $0x7d8] sm:$0xff]
    %v357 = vld [vmem:[#allocation6 + $0x7e0] sm:$0xff]
    %v358 = vld [vmem:[#allocation6 + $0x7e8] sm:$0xff]
    %v359 = vld [vmem:[#allocation6 + $0x7f0] sm:$0xff]
    %v360 = vld [vmem:[#allocation6 + $0x7f8] sm:$0xff]
    %v361 = vld [vmem:[#allocation6 + $0x800] sm:$0xff]
    %v362 = vld [vmem:[#allocation6 + $0x808] sm:$0xff]
    %v363 = vld [vmem:[#allocation6 + $0x810] sm:$0xff]
    %v364 = vld [vmem:[#allocation6 + $0x818] sm:$0xff]
    %v365 = vld [vmem:[#allocation6 + $0x820] sm:$0xff]
    %v366 = vld [vmem:[#allocation6 + $0x828] sm:$0xff]
    %v367 = vld [vmem:[#allocation6 + $0x830] sm:$0xff]
    %v368 = vld [vmem:[#allocation6 + $0x838] sm:$0xff]
    %v369 = vld [vmem:[#allocation6 + $0x840] sm:$0xff]
    %v370 = vld [vmem:[#allocation6 + $0x848] sm:$0xff]
    %v371 = vld [vmem:[#allocation6 + $0x850] sm:$0xff]
    %v372 = vld [vmem:[#allocation6 + $0x858] sm:$0xff]
    %v373 = vld [vmem:[#allocation6 + $0x860] sm:$0xff]
    %v374 = vld [vmem:[#allocation6 + $0x868] sm:$0xff]
    %v375 = vld [vmem:[#allocation6 + $0x870] sm:$0xff]
    %v376 = vld [vmem:[#allocation6 + $0x878] sm:$0xff]
    %v377 = vld [vmem:[#allocation6 + $0x880] sm:$0xff]
    %v378 = vld [vmem:[#allocation6 + $0x888] sm:$0xff]
    %v379 = vld [vmem:[#allocation6 + $0x890] sm:$0xff]
    %v380 = vld [vmem:[#allocation6 + $0x898] sm:$0xff]
    %v381 = vld [vmem:[#allocation6 + $0x8a0] sm:$0xff]
    %v382 = vld [vmem:[#allocation6 + $0x8a8] sm:$0xff]
    %v383 = vld [vmem:[#allocation6 + $0x8b0] sm:$0xff]
    %v384 = vld [vmem:[#allocation6 + $0x8b8] sm:$0xff]
    %v385 = vld [vmem:[#allocation6 + $0x8c0] sm:$0xff]
    %v386 = vld [vmem:[#allocation6 + $0x8c8] sm:$0xff]
    %v387 = vld [vmem:[#allocation6 + $0x8d0] sm:$0xff]
    %v388 = vld [vmem:[#allocation6 + $0x8d8] sm:$0xff]
    %v389 = vld [vmem:[#allocation6 + $0x8e0] sm:$0xff]
    %v390 = vld [vmem:[#allocation6 + $0x8e8] sm:$0xff]
    %v391 = vld [vmem:[#allocation6 + $0x8f0] sm:$0xff]
    %v392 = vld [vmem:[#allocation6 + $0x8f8] sm:$0xff]
    %v393 = vld [vmem:[#allocation6 + $0x900] sm:$0xff]
    %v394 = vld [vmem:[#allocation6 + $0x908] sm:$0xff]
    %v395 = vld [vmem:[#allocation6 + $0x910] sm:$0xff]
    %v396 = vld [vmem:[#allocation6 + $0x918] sm:$0xff]
    %v397 = vld [vmem:[#allocation6 + $0x920] sm:$0xff]
    %v398 = vld [vmem:[#allocation6 + $0x928] sm:$0xff]
    %v399 = vld [vmem:[#allocation6 + $0x930] sm:$0xff]
    %v400 = vld [vmem:[#allocation6 + $0x938] sm:$0xff]
    %v401 = vld [vmem:[#allocation6 + $0x940] sm:$0xff]
    %v402 = vld [vmem:[#allocation6 + $0x948] sm:$0xff]
    %v403 = vld [vmem:[#allocation6 + $0x950] sm:$0xff]
    %v404 = vld [vmem:[#allocation6 + $0x958] sm:$0xff]
    %v405 = vld [vmem:[#allocation6 + $0x960] sm:$0xff]
    %v406 = vld [vmem:[#allocation6 + $0x968] sm:$0xff]
    %v407 = vld [vmem:[#allocation6 + $0x970] sm:$0xff]
    %v408 = vld [vmem:[#allocation6 + $0x978] sm:$0xff]
    %v409 = vld [vmem:[#allocation6 + $0x980] sm:$0xff]
    %v410 = vld [vmem:[#allocation6 + $0x988] sm:$0xff]
    %v411 = vld [vmem:[#allocation6 + $0x990] sm:$0xff]
    %v412 = vld [vmem:[#allocation6 + $0x998] sm:$0xff]
    %v413 = vld [vmem:[#allocation6 + $0x9a0] sm:$0xff]
    %v414 = vld [vmem:[#allocation6 + $0x9a8] sm:$0xff]
    %v415 = vld [vmem:[#allocation6 + $0x9b0] sm:$0xff]
    %v416 = vld [vmem:[#allocation6 + $0x9b8] sm:$0xff]
    %v417 = vld [vmem:[#allocation6 + $0x9c0] sm:$0xff]
    %v418 = vld [vmem:[#allocation6 + $0x9c8] sm:$0xff]
    %v419 = vld [vmem:[#allocation6 + $0x9d0] sm:$0xff]
    %v420 = vld [vmem:[#allocation6 + $0x9d8] sm:$0xff]
    %v421 = vld [vmem:[#allocation6 + $0x9e0] sm:$0xff]
    %v422 = vld [vmem:[#allocation6 + $0x9e8] sm:$0xff]
    %v423 = vld [vmem:[#allocation6 + $0x9f0] sm:$0xff]
    %v424 = vld [vmem:[#allocation6 + $0x9f8] sm:$0xff]
    %v425 = vld [vmem:[#allocation6 + $0xa00] sm:$0xff]
    %v426 = vld [vmem:[#allocation6 + $0xa08] sm:$0xff]
    %v427 = vld [vmem:[#allocation6 + $0xa10] sm:$0xff]
    %v428 = vld [vmem:[#allocation6 + $0xa18] sm:$0xff]
    %v429 = vld [vmem:[#allocation6 + $0xa20] sm:$0xff]
    %v430 = vld [vmem:[#allocation6 + $0xa28] sm:$0xff]
    %v431 = vld [vmem:[#allocation6 + $0xa30] sm:$0xff]
    %v432 = vld [vmem:[#allocation6 + $0xa38] sm:$0xff]
    %v433 = vld [vmem:[#allocation6 + $0xa40] sm:$0xff]
    %v434 = vld [vmem:[#allocation6 + $0xa48] sm:$0xff]
    %v435 = vld [vmem:[#allocation6 + $0xa50] sm:$0xff]
    %v436 = vld [vmem:[#allocation6 + $0xa58] sm:$0xff]
    %v437 = vld [vmem:[#allocation6 + $0xa60] sm:$0xff]
    %v438 = vld [vmem:[#allocation6 + $0xa68] sm:$0xff]
    %v439 = vld [vmem:[#allocation6 + $0xa70] sm:$0xff]
    %v440 = vld [vmem:[#allocation6 + $0xa78] sm:$0xff]
    %v441 = vld [vmem:[#allocation6 + $0xa80] sm:$0xff]
    %v442 = vld [vmem:[#allocation6 + $0xa88] sm:$0xff]
    %v443 = vld [vmem:[#allocation6 + $0xa90] sm:$0xff]
    %v444 = vld [vmem:[#allocation6 + $0xa98] sm:$0xff]
    %v445 = vld [vmem:[#allocation6 + $0xaa0] sm:$0xff]
    %v446 = vld [vmem:[#allocation6 + $0xaa8] sm:$0xff]
    %v447 = vld [vmem:[#allocation6 + $0xab0] sm:$0xff]
    %v448 = vld [vmem:[#allocation6 + $0xab8] sm:$0xff]
    %v449 = vld [vmem:[#allocation6 + $0xac0] sm:$0xff]
    %v450 = vld [vmem:[#allocation6 + $0xac8] sm:$0xff]
    %v451 = vld [vmem:[#allocation6 + $0xad0] sm:$0xff]
    %v452 = vld [vmem:[#allocation6 + $0xad8] sm:$0xff]
    %v453 = vld [vmem:[#allocation6 + $0xae0] sm:$0xff]
    %v454 = vld [vmem:[#allocation6 + $0xae8] sm:$0xff]
    %v455 = vld [vmem:[#allocation6 + $0xaf0] sm:$0xff]
    %v456 = vld [vmem:[#allocation6 + $0xaf8] sm:$0xff]
    %v457 = vld [vmem:[#allocation6 + $0xb00] sm:$0xff]
    %v458 = vld [vmem:[#allocation6 + $0xb08] sm:$0xff]
    %v459 = vld [vmem:[#allocation6 + $0xb10] sm:$0xff]
    %v460 = vld [vmem:[#allocation6 + $0xb18] sm:$0xff]
    %v461 = vld [vmem:[#allocation6 + $0xb20] sm:$0xff]
    %v462 = vld [vmem:[#allocation6 + $0xb28] sm:$0xff]
    %v463 = vld [vmem:[#allocation6 + $0xb30] sm:$0xff]
    %v464 = vld [vmem:[#allocation6 + $0xb38] sm:$0xff]
    %v465 = vld [vmem:[#allocation6 + $0xb40] sm:$0xff]
    %v466 = vld [vmem:[#allocation6 + $0xb48] sm:$0xff]
    %v467 = vld [vmem:[#allocation6 + $0xb50] sm:$0xff]
    %v468 = vld [vmem:[#allocation6 + $0xb58] sm:$0xff]
    %v469 = vld [vmem:[#allocation6 + $0xb60] sm:$0xff]
    %v470 = vld [vmem:[#allocation6 + $0xb68] sm:$0xff]
    %v471 = vld [vmem:[#allocation6 + $0xb70] sm:$0xff]
    %v472 = vld [vmem:[#allocation6 + $0xb78] sm:$0xff]
    %v473 = vld [vmem:[#allocation6 + $0xb80] sm:$0xff]
    %v474 = vld [vmem:[#allocation6 + $0xb88] sm:$0xff]
    %v475 = vld [vmem:[#allocation6 + $0xb90] sm:$0xff]
    %v476 = vld [vmem:[#allocation6 + $0xb98] sm:$0xff]
    %v477 = vld [vmem:[#allocation6 + $0xba0] sm:$0xff]
    %v478 = vld [vmem:[#allocation6 + $0xba8] sm:$0xff]
    %v479 = vld [vmem:[#allocation6 + $0xbb0] sm:$0xff]
    %v480 = vld [vmem:[#allocation6 + $0xbb8] sm:$0xff]
    %v481 = vld [vmem:[#allocation6 + $0xbc0] sm:$0xff]
    %v482 = vld [vmem:[#allocation6 + $0xbc8] sm:$0xff]
    %v483 = vld [vmem:[#allocation6 + $0xbd0] sm:$0xff]
    %v484 = vld [vmem:[#allocation6 + $0xbd8] sm:$0xff]
    %v485 = vld [vmem:[#allocation6 + $0xbe0] sm:$0xff]
    %v486 = vld [vmem:[#allocation6 + $0xbe8] sm:$0xff]
    %v487 = vld [vmem:[#allocation6 + $0xbf0] sm:$0xff]
    %v488 = vld [vmem:[#allocation6 + $0xbf8] sm:$0xff]
    %v489 = vld [vmem:[#allocation6 + $0xc00] sm:$0xff]
    %v490 = vld [vmem:[#allocation6 + $0xc08] sm:$0xff]
    %v491 = vld [vmem:[#allocation6 + $0xc10] sm:$0xff]
    %v492 = vld [vmem:[#allocation6 + $0xc18] sm:$0xff]
    %v493 = vld [vmem:[#allocation6 + $0xc20] sm:$0xff]
    %v494 = vld [vmem:[#allocation6 + $0xc28] sm:$0xff]
    %v495 = vld [vmem:[#allocation6 + $0xc30] sm:$0xff]
    %v496 = vld [vmem:[#allocation6 + $0xc38] sm:$0xff]
    %v497 = vld [vmem:[#allocation8] sm:$0xff]
    %v499 = vlaneseq
    %v500 = vshrl.u32 %v499, 7
    %v501 = vsub.s32 0, %v500
    %v502 = vrot.slane %v497, %v501
    %v503 = vlaneseq
    %v504 = vshrl.u32 %v503, 7
    %v505 = vsub.s32 1, %v504
    %v506 = vrot.slane %v497, %v505
    %v507 = vlaneseq
    %v508 = vshrl.u32 %v507, 7
    %v509 = vsub.s32 2, %v508
    %v510 = vrot.slane %v497, %v509
    %v511 = vlaneseq
    %v512 = vshrl.u32 %v511, 7
    %v513 = vsub.s32 3, %v512
    %v514 = vrot.slane %v497, %v513
    %v515 = vlaneseq
    %v516 = vshrl.u32 %v515, 7
    %v517 = vsub.s32 4, %v516
    %v518 = vrot.slane %v497, %v517
    %v519 = vlaneseq
    %v520 = vshrl.u32 %v519, 7
    %v521 = vsub.s32 5, %v520
    %v522 = vrot.slane %v497, %v521
    %v523 = vlaneseq
    %v524 = vshrl.u32 %v523, 7
    %v525 = vsub.s32 6, %v524
    %v526 = vrot.slane %v497, %v525
    %v527 = vlaneseq
    %v528 = vshrl.u32 %v527, 7
    %v529 = vsub.s32 7, %v528
    %v530 = vrot.slane %v497, %v529
    %v931 = vunpack.c.l.b16 %v105
    %v932 = vunpack.c.h.b16 %v105
    %v933 = vunpack.c.l.b16 %v106
    %v934 = vunpack.c.h.b16 %v106
    %v935 = vunpack.c.l.b16 %v107
    %v936 = vunpack.c.h.b16 %v107
    %v937 = vunpack.c.l.b16 %v108
    %v938 = vunpack.c.h.b16 %v108
    %v939 = vunpack.c.l.b16 %v109
    %v940 = vunpack.c.h.b16 %v109
    %v941 = vunpack.c.l.b16 %v110
    %v942 = vunpack.c.h.b16 %v110
    %v943 = vunpack.c.l.b16 %v111
    %v944 = vunpack.c.h.b16 %v111
    %v945 = vunpack.c.l.b16 %v112
    %v946 = vunpack.c.h.b16 %v112
    %v947 = vunpack.c.l.b16 %v113
    %v948 = vunpack.c.h.b16 %v113
    %v949 = vunpack.c.l.b16 %v114
    %v950 = vunpack.c.h.b16 %v114
    %v951 = vunpack.c.l.b16 %v115
    %v952 = vunpack.c.h.b16 %v115
    %v953 = vunpack.c.l.b16 %v116
    %v954 = vunpack.c.h.b16 %v116
    %v955 = vunpack.c.l.b16 %v117
    %v956 = vunpack.c.h.b16 %v117
    %v957 = vunpack.c.l.b16 %v118
    %v958 = vunpack.c.h.b16 %v118
    %v959 = vunpack.c.l.b16 %v119
    %v960 = vunpack.c.h.b16 %v119
    %v961 = vunpack.c.l.b16 %v120
    %v962 = vunpack.c.h.b16 %v120
    %v963 = vunpack.c.l.b16 %v121
    %v964 = vunpack.c.h.b16 %v121
    %v965 = vunpack.c.l.b16 %v122
    %v966 = vunpack.c.h.b16 %v122
    %v967 = vunpack.c.l.b16 %v123
    %v968 = vunpack.c.h.b16 %v123
    %v969 = vunpack.c.l.b16 %v124
    %v970 = vunpack.c.h.b16 %v124
    %v971 = vunpack.c.l.b16 %v125
    %v972 = vunpack.c.h.b16 %v125
    %v973 = vunpack.c.l.b16 %v126
    %v974 = vunpack.c.h.b16 %v126
    %v975 = vunpack.c.l.b16 %v127
    %v976 = vunpack.c.h.b16 %v127
    %v977 = vunpack.c.l.b16 %v128
    %v978 = vunpack.c.h.b16 %v128
    %v979 = vunpack.c.l.b16 %v129
    %v980 = vunpack.c.h.b16 %v129
    %v981 = vunpack.c.l.b16 %v130
    %v982 = vunpack.c.h.b16 %v130
    %v983 = vunpack.c.l.b16 %v131
    %v984 = vunpack.c.h.b16 %v131
    %v985 = vunpack.c.l.b16 %v132
    %v986 = vunpack.c.h.b16 %v132
    %v987 = vunpack.c.l.b16 %v133
    %v988 = vunpack.c.h.b16 %v133
    %v989 = vunpack.c.l.b16 %v134
    %v990 = vunpack.c.h.b16 %v134
    %v991 = vunpack.c.l.b16 %v135
    %v992 = vunpack.c.h.b16 %v135
    %v993 = vunpack.c.l.b16 %v136
    %v994 = vunpack.c.h.b16 %v136
    %v995 = vunpack.c.l.b16 %v137
    %v996 = vunpack.c.h.b16 %v137
    %v997 = vunpack.c.l.b16 %v138
    %v998 = vunpack.c.h.b16 %v138
    %v999 = vunpack.c.l.b16 %v139
    %v1000 = vunpack.c.h.b16 %v139
    %v1001 = vunpack.c.l.b16 %v140
    %v1002 = vunpack.c.h.b16 %v140
    %v1003 = vunpack.c.l.b16 %v141
    %v1004 = vunpack.c.h.b16 %v141
    %v1005 = vunpack.c.l.b16 %v142
    %v1006 = vunpack.c.h.b16 %v142
    %v1007 = vunpack.c.l.b16 %v143
    %v1008 = vunpack.c.h.b16 %v143
    %v1009 = vunpack.c.l.b16 %v144
    %v1010 = vunpack.c.h.b16 %v144
    %v1011 = vunpack.c.l.b16 %v145
    %v1012 = vunpack.c.h.b16 %v145
    %v1013 = vunpack.c.l.b16 %v146
    %v1014 = vunpack.c.h.b16 %v146
    %v1015 = vunpack.c.l.b16 %v147
    %v1016 = vunpack.c.h.b16 %v147
    %v1017 = vunpack.c.l.b16 %v148
    %v1018 = vunpack.c.h.b16 %v148
    %v1019 = vunpack.c.l.b16 %v149
    %v1020 = vunpack.c.h.b16 %v149
    %v1021 = vunpack.c.l.b16 %v150
    %v1022 = vunpack.c.h.b16 %v150
    %v1023 = vunpack.c.l.b16 %v151
    %v1024 = vunpack.c.h.b16 %v151
    %v1025 = vunpack.c.l.b16 %v152
    %v1026 = vunpack.c.h.b16 %v152
    %v1027 = vunpack.c.l.b16 %v153
    %v1028 = vunpack.c.h.b16 %v153
    %v1029 = vunpack.c.l.b16 %v154
    %v1030 = vunpack.c.h.b16 %v154
    %v1031 = vunpack.c.l.b16 %v155
    %v1032 = vunpack.c.h.b16 %v155
    %v1033 = vunpack.c.l.b16 %v156
    %v1034 = vunpack.c.h.b16 %v156
    %v1035 = vunpack.c.l.b16 %v157
    %v1036 = vunpack.c.h.b16 %v157
    %v1037 = vunpack.c.l.b16 %v158
    %v1038 = vunpack.c.h.b16 %v158
    %v1039 = vunpack.c.l.b16 %v159
    %v1040 = vunpack.c.h.b16 %v159
    %v1041 = vunpack.c.l.b16 %v160
    %v1042 = vunpack.c.h.b16 %v160
    %v1043 = vunpack.c.l.b16 %v161
    %v1044 = vunpack.c.h.b16 %v161
    %v1045 = vunpack.c.l.b16 %v162
    %v1046 = vunpack.c.h.b16 %v162
    %v1047 = vunpack.c.l.b16 %v163
    %v1048 = vunpack.c.h.b16 %v163
    %v1049 = vunpack.c.l.b16 %v164
    %v1050 = vunpack.c.h.b16 %v164
    %v1051 = vunpack.c.l.b16 %v165
    %v1052 = vunpack.c.h.b16 %v165
    %v1053 = vunpack.c.l.b16 %v166
    %v1054 = vunpack.c.h.b16 %v166
    %v1055 = vunpack.c.l.b16 %v167
    %v1056 = vunpack.c.h.b16 %v167
    %v1057 = vunpack.c.l.b16 %v168
    %v1058 = vunpack.c.h.b16 %v168
    %v1059 = vunpack.c.l.b16 %v169
    %v1060 = vunpack.c.h.b16 %v169
    %v1061 = vunpack.c.l.b16 %v170
    %v1062 = vunpack.c.h.b16 %v170
    %v1063 = vunpack.c.l.b16 %v171
    %v1064 = vunpack.c.h.b16 %v171
    %v1065 = vunpack.c.l.b16 %v172
    %v1066 = vunpack.c.h.b16 %v172
    %v1067 = vunpack.c.l.b16 %v173
    %v1068 = vunpack.c.h.b16 %v173
    %v1069 = vunpack.c.l.b16 %v174
    %v1070 = vunpack.c.h.b16 %v174
    %v1071 = vunpack.c.l.b16 %v175
    %v1072 = vunpack.c.h.b16 %v175
    %v1073 = vunpack.c.l.b16 %v176
    %v1074 = vunpack.c.h.b16 %v176
    %v1075 = vunpack.c.l.b16 %v177
    %v1076 = vunpack.c.h.b16 %v177
    %v1077 = vunpack.c.l.b16 %v178
    %v1078 = vunpack.c.h.b16 %v178
    %v1079 = vunpack.c.l.b16 %v179
    %v1080 = vunpack.c.h.b16 %v179
    %v1081 = vunpack.c.l.b16 %v180
    %v1082 = vunpack.c.h.b16 %v180
    %v1083 = vunpack.c.l.b16 %v181
    %v1084 = vunpack.c.h.b16 %v181
    %v1085 = vunpack.c.l.b16 %v182
    %v1086 = vunpack.c.h.b16 %v182
    %v1087 = vunpack.c.l.b16 %v183
    %v1088 = vunpack.c.h.b16 %v183
    %v1089 = vunpack.c.l.b16 %v184
    %v1090 = vunpack.c.h.b16 %v184
    %v1091 = vunpack.c.l.b16 %v185
    %v1092 = vunpack.c.h.b16 %v185
    %v1093 = vunpack.c.l.b16 %v186
    %v1094 = vunpack.c.h.b16 %v186
    %v1095 = vunpack.c.l.b16 %v187
    %v1096 = vunpack.c.h.b16 %v187
    %v1097 = vunpack.c.l.b16 %v188
    %v1098 = vunpack.c.h.b16 %v188
    %v1099 = vunpack.c.l.b16 %v189
    %v1100 = vunpack.c.h.b16 %v189
    %v1101 = vunpack.c.l.b16 %v190
    %v1102 = vunpack.c.h.b16 %v190
    %v1103 = vunpack.c.l.b16 %v191
    %v1104 = vunpack.c.h.b16 %v191
    %v1105 = vunpack.c.l.b16 %v192
    %v1106 = vunpack.c.h.b16 %v192
    %v1107 = vunpack.c.l.b16 %v193
    %v1108 = vunpack.c.h.b16 %v193
    %v1109 = vunpack.c.l.b16 %v194
    %v1110 = vunpack.c.h.b16 %v194
    %v1111 = vunpack.c.l.b16 %v195
    %v1112 = vunpack.c.h.b16 %v195
    %v1113 = vunpack.c.l.b16 %v196
    %v1114 = vunpack.c.h.b16 %v196
    %v1115 = vunpack.c.l.b16 %v197
    %v1116 = vunpack.c.h.b16 %v197
    %v1117 = vunpack.c.l.b16 %v198
    %v1118 = vunpack.c.h.b16 %v198
    %v1119 = vunpack.c.l.b16 %v199
    %v1120 = vunpack.c.h.b16 %v199
    %v1121 = vunpack.c.l.b16 %v200
    %v1122 = vunpack.c.h.b16 %v200
    %v1123 = vunpack.c.l.b16 %v201
    %v1124 = vunpack.c.h.b16 %v201
    %v1125 = vunpack.c.l.b16 %v202
    %v1126 = vunpack.c.h.b16 %v202
    %v1127 = vunpack.c.l.b16 %v203
    %v1128 = vunpack.c.h.b16 %v203
    %v1129 = vunpack.c.l.b16 %v204
    %v1130 = vunpack.c.h.b16 %v204
    %v1131 = vunpack.c.l.b16 %v205
    %v1132 = vunpack.c.h.b16 %v205
    %v1133 = vunpack.c.l.b16 %v206
    %v1134 = vunpack.c.h.b16 %v206
    %v1135 = vunpack.c.l.b16 %v207
    %v1136 = vunpack.c.h.b16 %v207
    %v1137 = vunpack.c.l.b16 %v208
    %v1138 = vunpack.c.h.b16 %v208
    %v1139 = vunpack.c.l.b16 %v209
    %v1140 = vunpack.c.h.b16 %v209
    %v1141 = vunpack.c.l.b16 %v210
    %v1142 = vunpack.c.h.b16 %v210
    %v1143 = vunpack.c.l.b16 %v211
    %v1144 = vunpack.c.h.b16 %v211
    %v1145 = vunpack.c.l.b16 %v212
    %v1146 = vunpack.c.h.b16 %v212
    %v1147 = vunpack.c.l.b16 %v213
    %v1148 = vunpack.c.h.b16 %v213
    %v1149 = vunpack.c.l.b16 %v214
    %v1150 = vunpack.c.h.b16 %v214
    %v1151 = vunpack.c.l.b16 %v215
    %v1152 = vunpack.c.h.b16 %v215
    %v1153 = vunpack.c.l.b16 %v216
    %v1154 = vunpack.c.h.b16 %v216
    %v1155 = vunpack.c.l.b16 %v217
    %v1156 = vunpack.c.h.b16 %v217
    %v1157 = vunpack.c.l.b16 %v218
    %v1158 = vunpack.c.h.b16 %v218
    %v1159 = vunpack.c.l.b16 %v219
    %v1160 = vunpack.c.h.b16 %v219
    %v1161 = vunpack.c.l.b16 %v220
    %v1162 = vunpack.c.h.b16 %v220
    %v1163 = vunpack.c.l.b16 %v221
    %v1164 = vunpack.c.h.b16 %v221
    %v1165 = vunpack.c.l.b16 %v222
    %v1166 = vunpack.c.h.b16 %v222
    %v1167 = vunpack.c.l.b16 %v223
    %v1168 = vunpack.c.h.b16 %v223
    %v1169 = vunpack.c.l.b16 %v224
    %v1170 = vunpack.c.h.b16 %v224
    %v1171 = vunpack.c.l.b16 %v225
    %v1172 = vunpack.c.h.b16 %v225
    %v1173 = vunpack.c.l.b16 %v226
    %v1174 = vunpack.c.h.b16 %v226
    %v1175 = vunpack.c.l.b16 %v227
    %v1176 = vunpack.c.h.b16 %v227
    %v1177 = vunpack.c.l.b16 %v228
    %v1178 = vunpack.c.h.b16 %v228
    %v1179 = vunpack.c.l.b16 %v229
    %v1180 = vunpack.c.h.b16 %v229
    %v1181 = vunpack.c.l.b16 %v230
    %v1182 = vunpack.c.h.b16 %v230
    %v1183 = vunpack.c.l.b16 %v231
    %v1184 = vunpack.c.h.b16 %v231
    %v1185 = vunpack.c.l.b16 %v232
    %v1186 = vunpack.c.h.b16 %v232
    %v1187 = vunpack.c.l.b16 %v233
    %v1188 = vunpack.c.h.b16 %v233
    %v1189 = vunpack.c.l.b16 %v234
    %v1190 = vunpack.c.h.b16 %v234
    %v1191 = vunpack.c.l.b16 %v235
    %v1192 = vunpack.c.h.b16 %v235
    %v1193 = vunpack.c.l.b16 %v236
    %v1194 = vunpack.c.h.b16 %v236
    %v1195 = vunpack.c.l.b16 %v237
    %v1196 = vunpack.c.h.b16 %v237
    %v1197 = vunpack.c.l.b16 %v238
    %v1198 = vunpack.c.h.b16 %v238
    %v1199 = vunpack.c.l.b16 %v239
    %v1200 = vunpack.c.h.b16 %v239
    %v1201 = vunpack.c.l.b16 %v240
    %v1202 = vunpack.c.h.b16 %v240
    %v1203 = vunpack.c.l.b16 %v241
    %v1204 = vunpack.c.h.b16 %v241
    %v1205 = vunpack.c.l.b16 %v242
    %v1206 = vunpack.c.h.b16 %v242
    %v1207 = vunpack.c.l.b16 %v243
    %v1208 = vunpack.c.h.b16 %v243
    %v1209 = vunpack.c.l.b16 %v244
    %v1210 = vunpack.c.h.b16 %v244
    %v1211 = vunpack.c.l.b16 %v245
    %v1212 = vunpack.c.h.b16 %v245
    %v1213 = vunpack.c.l.b16 %v246
    %v1214 = vunpack.c.h.b16 %v246
    %v1215 = vunpack.c.l.b16 %v247
    %v1216 = vunpack.c.h.b16 %v247
    %v1217 = vunpack.c.l.b16 %v248
    %v1218 = vunpack.c.h.b16 %v248
    %v1219 = vunpack.c.l.b16 %v249
    %v1220 = vunpack.c.h.b16 %v249
    %v1221 = vunpack.c.l.b16 %v250
    %v1222 = vunpack.c.h.b16 %v250
    %v1223 = vunpack.c.l.b16 %v251
    %v1224 = vunpack.c.h.b16 %v251
    %v1225 = vunpack.c.l.b16 %v252
    %v1226 = vunpack.c.h.b16 %v252
    %v1227 = vunpack.c.l.b16 %v253
    %v1228 = vunpack.c.h.b16 %v253
    %v1229 = vunpack.c.l.b16 %v254
    %v1230 = vunpack.c.h.b16 %v254
    %v1231 = vunpack.c.l.b16 %v255
    %v1232 = vunpack.c.h.b16 %v255
    %v1233 = vunpack.c.l.b16 %v256
    %v1234 = vunpack.c.h.b16 %v256
    %v1235 = vunpack.c.l.b16 %v257
    %v1236 = vunpack.c.h.b16 %v257
    %v1237 = vunpack.c.l.b16 %v258
    %v1238 = vunpack.c.h.b16 %v258
    %v1239 = vunpack.c.l.b16 %v259
    %v1240 = vunpack.c.h.b16 %v259
    %v1241 = vunpack.c.l.b16 %v260
    %v1242 = vunpack.c.h.b16 %v260
    %v1243 = vunpack.c.l.b16 %v261
    %v1244 = vunpack.c.h.b16 %v261
    %v1245 = vunpack.c.l.b16 %v262
    %v1246 = vunpack.c.h.b16 %v262
    %v1247 = vunpack.c.l.b16 %v263
    %v1248 = vunpack.c.h.b16 %v263
    %v1249 = vunpack.c.l.b16 %v264
    %v1250 = vunpack.c.h.b16 %v264
    %v1251 = vunpack.c.l.b16 %v265
    %v1252 = vunpack.c.h.b16 %v265
    %v1253 = vunpack.c.l.b16 %v266
    %v1254 = vunpack.c.h.b16 %v266
    %v1255 = vunpack.c.l.b16 %v267
    %v1256 = vunpack.c.h.b16 %v267
    %v1257 = vunpack.c.l.b16 %v268
    %v1258 = vunpack.c.h.b16 %v268
    %v1259 = vunpack.c.l.b16 %v269
    %v1260 = vunpack.c.h.b16 %v269
    %v1261 = vunpack.c.l.b16 %v270
    %v1262 = vunpack.c.h.b16 %v270
    %v1263 = vunpack.c.l.b16 %v271
    %v1264 = vunpack.c.h.b16 %v271
    %v1265 = vunpack.c.l.b16 %v272
    %v1266 = vunpack.c.h.b16 %v272
    %v1267 = vunpack.c.l.b16 %v273
    %v1268 = vunpack.c.h.b16 %v273
    %v1269 = vunpack.c.l.b16 %v274
    %v1270 = vunpack.c.h.b16 %v274
    %v1271 = vunpack.c.l.b16 %v275
    %v1272 = vunpack.c.h.b16 %v275
    %v1273 = vunpack.c.l.b16 %v276
    %v1274 = vunpack.c.h.b16 %v276
    %v1275 = vunpack.c.l.b16 %v277
    %v1276 = vunpack.c.h.b16 %v277
    %v1277 = vunpack.c.l.b16 %v278
    %v1278 = vunpack.c.h.b16 %v278
    %v1279 = vunpack.c.l.b16 %v279
    %v1280 = vunpack.c.h.b16 %v279
    %v1281 = vunpack.c.l.b16 %v280
    %v1282 = vunpack.c.h.b16 %v280
    %v1283 = vunpack.c.l.b16 %v281
    %v1284 = vunpack.c.h.b16 %v281
    %v1285 = vunpack.c.l.b16 %v282
    %v1286 = vunpack.c.h.b16 %v282
    %v1287 = vunpack.c.l.b16 %v283
    %v1288 = vunpack.c.h.b16 %v283
    %v1289 = vunpack.c.l.b16 %v284
    %v1290 = vunpack.c.h.b16 %v284
    %v1291 = vunpack.c.l.b16 %v285
    %v1292 = vunpack.c.h.b16 %v285
    %v1293 = vunpack.c.l.b16 %v286
    %v1294 = vunpack.c.h.b16 %v286
    %v1295 = vunpack.c.l.b16 %v287
    %v1296 = vunpack.c.h.b16 %v287
    %v1297 = vunpack.c.l.b16 %v288
    %v1298 = vunpack.c.h.b16 %v288
    %v1299 = vunpack.c.l.b16 %v289
    %v1300 = vunpack.c.h.b16 %v289
    %v1301 = vunpack.c.l.b16 %v290
    %v1302 = vunpack.c.h.b16 %v290
    %v1303 = vunpack.c.l.b16 %v291
    %v1304 = vunpack.c.h.b16 %v291
    %v1305 = vunpack.c.l.b16 %v292
    %v1306 = vunpack.c.h.b16 %v292
    %v1307 = vunpack.c.l.b16 %v293
    %v1308 = vunpack.c.h.b16 %v293
    %v1309 = vunpack.c.l.b16 %v294
    %v1310 = vunpack.c.h.b16 %v294
    %v1311 = vunpack.c.l.b16 %v295
    %v1312 = vunpack.c.h.b16 %v295
    %v1313 = vunpack.c.l.b16 %v296
    %v1314 = vunpack.c.h.b16 %v296
    %v1315 = vunpack.c.l.b16 %v297
    %v1316 = vunpack.c.h.b16 %v297
    %v1317 = vunpack.c.l.b16 %v298
    %v1318 = vunpack.c.h.b16 %v298
    %v1319 = vunpack.c.l.b16 %v299
    %v1320 = vunpack.c.h.b16 %v299
    %v1321 = vunpack.c.l.b16 %v300
    %v1322 = vunpack.c.h.b16 %v300
    %v1323 = vunpack.c.l.b16 %v301
    %v1324 = vunpack.c.h.b16 %v301
    %v1325 = vunpack.c.l.b16 %v302
    %v1326 = vunpack.c.h.b16 %v302
    %v1327 = vunpack.c.l.b16 %v303
    %v1328 = vunpack.c.h.b16 %v303
    %v1329 = vunpack.c.l.b16 %v304
    %v1330 = vunpack.c.h.b16 %v304
    %v1331 = vunpack.c.l.b16 %v305
    %v1332 = vunpack.c.h.b16 %v305
    %v1333 = vunpack.c.l.b16 %v306
    %v1334 = vunpack.c.h.b16 %v306
    %v1335 = vunpack.c.l.b16 %v307
    %v1336 = vunpack.c.h.b16 %v307
    %v1337 = vunpack.c.l.b16 %v308
    %v1338 = vunpack.c.h.b16 %v308
    %v1339 = vunpack.c.l.b16 %v309
    %v1340 = vunpack.c.h.b16 %v309
    %v1341 = vunpack.c.l.b16 %v310
    %v1342 = vunpack.c.h.b16 %v310
    %v1343 = vunpack.c.l.b16 %v311
    %v1344 = vunpack.c.h.b16 %v311
    %v1345 = vunpack.c.l.b16 %v312
    %v1346 = vunpack.c.h.b16 %v312
    %v1347 = vunpack.c.l.b16 %v313
    %v1348 = vunpack.c.h.b16 %v313
    %v1349 = vunpack.c.l.b16 %v314
    %v1350 = vunpack.c.h.b16 %v314
    %v1351 = vunpack.c.l.b16 %v315
    %v1352 = vunpack.c.h.b16 %v315
    %v1353 = vunpack.c.l.b16 %v316
    %v1354 = vunpack.c.h.b16 %v316
    %v1355 = vunpack.c.l.b16 %v317
    %v1356 = vunpack.c.h.b16 %v317
    %v1357 = vunpack.c.l.b16 %v318
    %v1358 = vunpack.c.h.b16 %v318
    %v1359 = vunpack.c.l.b16 %v319
    %v1360 = vunpack.c.h.b16 %v319
    %v1361 = vunpack.c.l.b16 %v320
    %v1362 = vunpack.c.h.b16 %v320
    %v1363 = vunpack.c.l.b16 %v321
    %v1364 = vunpack.c.h.b16 %v321
    %v1365 = vunpack.c.l.b16 %v322
    %v1366 = vunpack.c.h.b16 %v322
    %v1367 = vunpack.c.l.b16 %v323
    %v1368 = vunpack.c.h.b16 %v323
    %v1369 = vunpack.c.l.b16 %v324
    %v1370 = vunpack.c.h.b16 %v324
    %v1371 = vunpack.c.l.b16 %v325
    %v1372 = vunpack.c.h.b16 %v325
    %v1373 = vunpack.c.l.b16 %v326
    %v1374 = vunpack.c.h.b16 %v326
    %v1375 = vunpack.c.l.b16 %v327
    %v1376 = vunpack.c.h.b16 %v327
    %v1377 = vunpack.c.l.b16 %v328
    %v1378 = vunpack.c.h.b16 %v328
    %v1379 = vunpack.c.l.b16 %v329
    %v1380 = vunpack.c.h.b16 %v329
    %v1381 = vunpack.c.l.b16 %v330
    %v1382 = vunpack.c.h.b16 %v330
    %v1383 = vunpack.c.l.b16 %v331
    %v1384 = vunpack.c.h.b16 %v331
    %v1385 = vunpack.c.l.b16 %v332
    %v1386 = vunpack.c.h.b16 %v332
    %v1387 = vunpack.c.l.b16 %v333
    %v1388 = vunpack.c.h.b16 %v333
    %v1389 = vunpack.c.l.b16 %v334
    %v1390 = vunpack.c.h.b16 %v334
    %v1391 = vunpack.c.l.b16 %v335
    %v1392 = vunpack.c.h.b16 %v335
    %v1393 = vunpack.c.l.b16 %v336
    %v1394 = vunpack.c.h.b16 %v336
    %v1395 = vunpack.c.l.b16 %v337
    %v1396 = vunpack.c.h.b16 %v337
    %v1397 = vunpack.c.l.b16 %v338
    %v1398 = vunpack.c.h.b16 %v338
    %v1399 = vunpack.c.l.b16 %v339
    %v1400 = vunpack.c.h.b16 %v339
    %v1401 = vunpack.c.l.b16 %v340
    %v1402 = vunpack.c.h.b16 %v340
    %v1403 = vunpack.c.l.b16 %v341
    %v1404 = vunpack.c.h.b16 %v341
    %v1405 = vunpack.c.l.b16 %v342
    %v1406 = vunpack.c.h.b16 %v342
    %v1407 = vunpack.c.l.b16 %v343
    %v1408 = vunpack.c.h.b16 %v343
    %v1409 = vunpack.c.l.b16 %v344
    %v1410 = vunpack.c.h.b16 %v344
    %v1411 = vunpack.c.l.b16 %v345
    %v1412 = vunpack.c.h.b16 %v345
    %v1413 = vunpack.c.l.b16 %v346
    %v1414 = vunpack.c.h.b16 %v346
    %v1415 = vunpack.c.l.b16 %v347
    %v1416 = vunpack.c.h.b16 %v347
    %v1417 = vunpack.c.l.b16 %v348
    %v1418 = vunpack.c.h.b16 %v348
    %v1419 = vunpack.c.l.b16 %v349
    %v1420 = vunpack.c.h.b16 %v349
    %v1421 = vunpack.c.l.b16 %v350
    %v1422 = vunpack.c.h.b16 %v350
    %v1423 = vunpack.c.l.b16 %v351
    %v1424 = vunpack.c.h.b16 %v351
    %v1425 = vunpack.c.l.b16 %v352
    %v1426 = vunpack.c.h.b16 %v352
    %v1427 = vunpack.c.l.b16 %v353
    %v1428 = vunpack.c.h.b16 %v353
    %v1429 = vunpack.c.l.b16 %v354
    %v1430 = vunpack.c.h.b16 %v354
    %v1431 = vunpack.c.l.b16 %v355
    %v1432 = vunpack.c.h.b16 %v355
    %v1433 = vunpack.c.l.b16 %v356
    %v1434 = vunpack.c.h.b16 %v356
    %v1435 = vunpack.c.l.b16 %v357
    %v1436 = vunpack.c.h.b16 %v357
    %v1437 = vunpack.c.l.b16 %v358
    %v1438 = vunpack.c.h.b16 %v358
    %v1439 = vunpack.c.l.b16 %v359
    %v1440 = vunpack.c.h.b16 %v359
    %v1441 = vunpack.c.l.b16 %v360
    %v1442 = vunpack.c.h.b16 %v360
    %v1443 = vunpack.c.l.b16 %v361
    %v1444 = vunpack.c.h.b16 %v361
    %v1445 = vunpack.c.l.b16 %v362
    %v1446 = vunpack.c.h.b16 %v362
    %v1447 = vunpack.c.l.b16 %v363
    %v1448 = vunpack.c.h.b16 %v363
    %v1449 = vunpack.c.l.b16 %v364
    %v1450 = vunpack.c.h.b16 %v364
    %v1451 = vunpack.c.l.b16 %v365
    %v1452 = vunpack.c.h.b16 %v365
    %v1453 = vunpack.c.l.b16 %v366
    %v1454 = vunpack.c.h.b16 %v366
    %v1455 = vunpack.c.l.b16 %v367
    %v1456 = vunpack.c.h.b16 %v367
    %v1457 = vunpack.c.l.b16 %v368
    %v1458 = vunpack.c.h.b16 %v368
    %v1459 = vunpack.c.l.b16 %v369
    %v1460 = vunpack.c.h.b16 %v369
    %v1461 = vunpack.c.l.b16 %v370
    %v1462 = vunpack.c.h.b16 %v370
    %v1463 = vunpack.c.l.b16 %v371
    %v1464 = vunpack.c.h.b16 %v371
    %v1465 = vunpack.c.l.b16 %v372
    %v1466 = vunpack.c.h.b16 %v372
    %v1467 = vunpack.c.l.b16 %v373
    %v1468 = vunpack.c.h.b16 %v373
    %v1469 = vunpack.c.l.b16 %v374
    %v1470 = vunpack.c.h.b16 %v374
    %v1471 = vunpack.c.l.b16 %v375
    %v1472 = vunpack.c.h.b16 %v375
    %v1473 = vunpack.c.l.b16 %v376
    %v1474 = vunpack.c.h.b16 %v376
    %v1475 = vunpack.c.l.b16 %v377
    %v1476 = vunpack.c.h.b16 %v377
    %v1477 = vunpack.c.l.b16 %v378
    %v1478 = vunpack.c.h.b16 %v378
    %v1479 = vunpack.c.l.b16 %v379
    %v1480 = vunpack.c.h.b16 %v379
    %v1481 = vunpack.c.l.b16 %v380
    %v1482 = vunpack.c.h.b16 %v380
    %v1483 = vunpack.c.l.b16 %v381
    %v1484 = vunpack.c.h.b16 %v381
    %v1485 = vunpack.c.l.b16 %v382
    %v1486 = vunpack.c.h.b16 %v382
    %v1487 = vunpack.c.l.b16 %v383
    %v1488 = vunpack.c.h.b16 %v383
    %v1489 = vunpack.c.l.b16 %v384
    %v1490 = vunpack.c.h.b16 %v384
    %v1491 = vunpack.c.l.b16 %v385
    %v1492 = vunpack.c.h.b16 %v385
    %v1493 = vunpack.c.l.b16 %v386
    %v1494 = vunpack.c.h.b16 %v386
    %v1495 = vunpack.c.l.b16 %v387
    %v1496 = vunpack.c.h.b16 %v387
    %v1497 = vunpack.c.l.b16 %v388
    %v1498 = vunpack.c.h.b16 %v388
    %v1499 = vunpack.c.l.b16 %v389
    %v1500 = vunpack.c.h.b16 %v389
    %v1501 = vunpack.c.l.b16 %v390
    %v1502 = vunpack.c.h.b16 %v390
    %v1503 = vunpack.c.l.b16 %v391
    %v1504 = vunpack.c.h.b16 %v391
    %v1505 = vunpack.c.l.b16 %v392
    %v1506 = vunpack.c.h.b16 %v392
    %v1507 = vunpack.c.l.b16 %v393
    %v1508 = vunpack.c.h.b16 %v393
    %v1509 = vunpack.c.l.b16 %v394
    %v1510 = vunpack.c.h.b16 %v394
    %v1511 = vunpack.c.l.b16 %v395
    %v1512 = vunpack.c.h.b16 %v395
    %v1513 = vunpack.c.l.b16 %v396
    %v1514 = vunpack.c.h.b16 %v396
    %v1515 = vunpack.c.l.b16 %v397
    %v1516 = vunpack.c.h.b16 %v397
    %v1517 = vunpack.c.l.b16 %v398
    %v1518 = vunpack.c.h.b16 %v398
    %v1519 = vunpack.c.l.b16 %v399
    %v1520 = vunpack.c.h.b16 %v399
    %v1521 = vunpack.c.l.b16 %v400
    %v1522 = vunpack.c.h.b16 %v400
    %v1523 = vunpack.c.l.b16 %v401
    %v1524 = vunpack.c.h.b16 %v401
    %v1525 = vunpack.c.l.b16 %v402
    %v1526 = vunpack.c.h.b16 %v402
    %v1527 = vunpack.c.l.b16 %v403
    %v1528 = vunpack.c.h.b16 %v403
    %v1529 = vunpack.c.l.b16 %v404
    %v1530 = vunpack.c.h.b16 %v404
    %v1531 = vunpack.c.l.b16 %v405
    %v1532 = vunpack.c.h.b16 %v405
    %v1533 = vunpack.c.l.b16 %v406
    %v1534 = vunpack.c.h.b16 %v406
    %v1535 = vunpack.c.l.b16 %v407
    %v1536 = vunpack.c.h.b16 %v407
    %v1537 = vunpack.c.l.b16 %v408
    %v1538 = vunpack.c.h.b16 %v408
    %v1539 = vunpack.c.l.b16 %v409
    %v1540 = vunpack.c.h.b16 %v409
    %v1541 = vunpack.c.l.b16 %v410
    %v1542 = vunpack.c.h.b16 %v410
    %v1543 = vunpack.c.l.b16 %v411
    %v1544 = vunpack.c.h.b16 %v411
    %v1545 = vunpack.c.l.b16 %v412
    %v1546 = vunpack.c.h.b16 %v412
    %v1547 = vunpack.c.l.b16 %v413
    %v1548 = vunpack.c.h.b16 %v413
    %v1549 = vunpack.c.l.b16 %v414
    %v1550 = vunpack.c.h.b16 %v414
    %v1551 = vunpack.c.l.b16 %v415
    %v1552 = vunpack.c.h.b16 %v415
    %v1553 = vunpack.c.l.b16 %v416
    %v1554 = vunpack.c.h.b16 %v416
    %v1555 = vunpack.c.l.b16 %v417
    %v1556 = vunpack.c.h.b16 %v417
    %v1557 = vunpack.c.l.b16 %v418
    %v1558 = vunpack.c.h.b16 %v418
    %v1559 = vunpack.c.l.b16 %v419
    %v1560 = vunpack.c.h.b16 %v419
    %v1561 = vunpack.c.l.b16 %v420
    %v1562 = vunpack.c.h.b16 %v420
    %v1563 = vunpack.c.l.b16 %v421
    %v1564 = vunpack.c.h.b16 %v421
    %v1565 = vunpack.c.l.b16 %v422
    %v1566 = vunpack.c.h.b16 %v422
    %v1567 = vunpack.c.l.b16 %v423
    %v1568 = vunpack.c.h.b16 %v423
    %v1569 = vunpack.c.l.b16 %v424
    %v1570 = vunpack.c.h.b16 %v424
    %v1571 = vunpack.c.l.b16 %v425
    %v1572 = vunpack.c.h.b16 %v425
    %v1573 = vunpack.c.l.b16 %v426
    %v1574 = vunpack.c.h.b16 %v426
    %v1575 = vunpack.c.l.b16 %v427
    %v1576 = vunpack.c.h.b16 %v427
    %v1577 = vunpack.c.l.b16 %v428
    %v1578 = vunpack.c.h.b16 %v428
    %v1579 = vunpack.c.l.b16 %v429
    %v1580 = vunpack.c.h.b16 %v429
    %v1581 = vunpack.c.l.b16 %v430
    %v1582 = vunpack.c.h.b16 %v430
    %v1583 = vunpack.c.l.b16 %v431
    %v1584 = vunpack.c.h.b16 %v431
    %v1585 = vunpack.c.l.b16 %v432
    %v1586 = vunpack.c.h.b16 %v432
    %v1587 = vunpack.c.l.b16 %v433
    %v1588 = vunpack.c.h.b16 %v433
    %v1589 = vunpack.c.l.b16 %v434
    %v1590 = vunpack.c.h.b16 %v434
    %v1591 = vunpack.c.l.b16 %v435
    %v1592 = vunpack.c.h.b16 %v435
    %v1593 = vunpack.c.l.b16 %v436
    %v1594 = vunpack.c.h.b16 %v436
    %v1595 = vunpack.c.l.b16 %v437
    %v1596 = vunpack.c.h.b16 %v437
    %v1597 = vunpack.c.l.b16 %v438
    %v1598 = vunpack.c.h.b16 %v438
    %v1599 = vunpack.c.l.b16 %v439
    %v1600 = vunpack.c.h.b16 %v439
    %v1601 = vunpack.c.l.b16 %v440
    %v1602 = vunpack.c.h.b16 %v440
    %v1603 = vunpack.c.l.b16 %v441
    %v1604 = vunpack.c.h.b16 %v441
    %v1605 = vunpack.c.l.b16 %v442
    %v1606 = vunpack.c.h.b16 %v442
    %v1607 = vunpack.c.l.b16 %v443
    %v1608 = vunpack.c.h.b16 %v443
    %v1609 = vunpack.c.l.b16 %v444
    %v1610 = vunpack.c.h.b16 %v444
    %v1611 = vunpack.c.l.b16 %v445
    %v1612 = vunpack.c.h.b16 %v445
    %v1613 = vunpack.c.l.b16 %v446
    %v1614 = vunpack.c.h.b16 %v446
    %v1615 = vunpack.c.l.b16 %v447
    %v1616 = vunpack.c.h.b16 %v447
    %v1617 = vunpack.c.l.b16 %v448
    %v1618 = vunpack.c.h.b16 %v448
    %v1619 = vunpack.c.l.b16 %v449
    %v1620 = vunpack.c.h.b16 %v449
    %v1621 = vunpack.c.l.b16 %v450
    %v1622 = vunpack.c.h.b16 %v450
    %v1623 = vunpack.c.l.b16 %v451
    %v1624 = vunpack.c.h.b16 %v451
    %v1625 = vunpack.c.l.b16 %v452
    %v1626 = vunpack.c.h.b16 %v452
    %v1627 = vunpack.c.l.b16 %v453
    %v1628 = vunpack.c.h.b16 %v453
    %v1629 = vunpack.c.l.b16 %v454
    %v1630 = vunpack.c.h.b16 %v454
    %v1631 = vunpack.c.l.b16 %v455
    %v1632 = vunpack.c.h.b16 %v455
    %v1633 = vunpack.c.l.b16 %v456
    %v1634 = vunpack.c.h.b16 %v456
    %v1635 = vunpack.c.l.b16 %v457
    %v1636 = vunpack.c.h.b16 %v457
    %v1637 = vunpack.c.l.b16 %v458
    %v1638 = vunpack.c.h.b16 %v458
    %v1639 = vunpack.c.l.b16 %v459
    %v1640 = vunpack.c.h.b16 %v459
    %v1641 = vunpack.c.l.b16 %v460
    %v1642 = vunpack.c.h.b16 %v460
    %v1643 = vunpack.c.l.b16 %v461
    %v1644 = vunpack.c.h.b16 %v461
    %v1645 = vunpack.c.l.b16 %v462
    %v1646 = vunpack.c.h.b16 %v462
    %v1647 = vunpack.c.l.b16 %v463
    %v1648 = vunpack.c.h.b16 %v463
    %v1649 = vunpack.c.l.b16 %v464
    %v1650 = vunpack.c.h.b16 %v464
    %v1651 = vunpack.c.l.b16 %v465
    %v1652 = vunpack.c.h.b16 %v465
    %v1653 = vunpack.c.l.b16 %v466
    %v1654 = vunpack.c.h.b16 %v466
    %v1655 = vunpack.c.l.b16 %v467
    %v1656 = vunpack.c.h.b16 %v467
    %v1657 = vunpack.c.l.b16 %v468
    %v1658 = vunpack.c.h.b16 %v468
    %v1659 = vunpack.c.l.b16 %v469
    %v1660 = vunpack.c.h.b16 %v469
    %v1661 = vunpack.c.l.b16 %v470
    %v1662 = vunpack.c.h.b16 %v470
    %v1663 = vunpack.c.l.b16 %v471
    %v1664 = vunpack.c.h.b16 %v471
    %v1665 = vunpack.c.l.b16 %v472
    %v1666 = vunpack.c.h.b16 %v472
    %v1667 = vunpack.c.l.b16 %v473
    %v1668 = vunpack.c.h.b16 %v473
    %v1669 = vunpack.c.l.b16 %v474
    %v1670 = vunpack.c.h.b16 %v474
    %v1671 = vunpack.c.l.b16 %v475
    %v1672 = vunpack.c.h.b16 %v475
    %v1673 = vunpack.c.l.b16 %v476
    %v1674 = vunpack.c.h.b16 %v476
    %v1675 = vunpack.c.l.b16 %v477
    %v1676 = vunpack.c.h.b16 %v477
    %v1677 = vunpack.c.l.b16 %v478
    %v1678 = vunpack.c.h.b16 %v478
    %v1679 = vunpack.c.l.b16 %v479
    %v1680 = vunpack.c.h.b16 %v479
    %v1681 = vunpack.c.l.b16 %v480
    %v1682 = vunpack.c.h.b16 %v480
    %v1683 = vunpack.c.l.b16 %v481
    %v1684 = vunpack.c.h.b16 %v481
    %v1685 = vunpack.c.l.b16 %v482
    %v1686 = vunpack.c.h.b16 %v482
    %v1687 = vunpack.c.l.b16 %v483
    %v1688 = vunpack.c.h.b16 %v483
    %v1689 = vunpack.c.l.b16 %v484
    %v1690 = vunpack.c.h.b16 %v484
    %v1691 = vunpack.c.l.b16 %v485
    %v1692 = vunpack.c.h.b16 %v485
    %v1693 = vunpack.c.l.b16 %v486
    %v1694 = vunpack.c.h.b16 %v486
    %v1695 = vunpack.c.l.b16 %v487
    %v1696 = vunpack.c.h.b16 %v487
    %v1697 = vunpack.c.l.b16 %v488
    %v1698 = vunpack.c.h.b16 %v488
    %v1699 = vunpack.c.l.b16 %v489
    %v1700 = vunpack.c.h.b16 %v489
    %v1701 = vunpack.c.l.b16 %v490
    %v1702 = vunpack.c.h.b16 %v490
    %v1703 = vunpack.c.l.b16 %v491
    %v1704 = vunpack.c.h.b16 %v491
    %v1705 = vunpack.c.l.b16 %v492
    %v1706 = vunpack.c.h.b16 %v492
    %v1707 = vunpack.c.l.b16 %v493
    %v1708 = vunpack.c.h.b16 %v493
    %v1709 = vunpack.c.l.b16 %v494
    %v1710 = vunpack.c.h.b16 %v494
    %v1711 = vunpack.c.l.b16 %v495
    %v1712 = vunpack.c.h.b16 %v495
    %v1713 = vunpack.c.l.b16 %v496
    %v1714 = vunpack.c.h.b16 %v496
    %v1715 = vpack.c.b16 %v939, %v931
    %v1716 = vpack.c.b16 %v940, %v932
    %v1717 = vpack.c.b16 %v941, %v933
    %v1718 = vpack.c.b16 %v942, %v934
    %v1719 = vpack.c.b16 %v943, %v935
    %v1720 = vpack.c.b16 %v944, %v936
    %v1721 = vpack.c.b16 %v945, %v937
    %v1722 = vpack.c.b16 %v946, %v938
    %v1723 = vpack.c.b16 %v955, %v947
    %v1724 = vpack.c.b16 %v956, %v948
    %v1725 = vpack.c.b16 %v957, %v949
    %v1726 = vpack.c.b16 %v958, %v950
    %v1727 = vpack.c.b16 %v959, %v951
    %v1728 = vpack.c.b16 %v960, %v952
    %v1729 = vpack.c.b16 %v961, %v953
    %v1730 = vpack.c.b16 %v962, %v954
    %v1731 = vpack.c.b16 %v971, %v963
    %v1732 = vpack.c.b16 %v972, %v964
    %v1733 = vpack.c.b16 %v973, %v965
    %v1734 = vpack.c.b16 %v974, %v966
    %v1735 = vpack.c.b16 %v975, %v967
    %v1736 = vpack.c.b16 %v976, %v968
    %v1737 = vpack.c.b16 %v977, %v969
    %v1738 = vpack.c.b16 %v978, %v970
    %v1739 = vpack.c.b16 %v987, %v979
    %v1740 = vpack.c.b16 %v988, %v980
    %v1741 = vpack.c.b16 %v989, %v981
    %v1742 = vpack.c.b16 %v990, %v982
    %v1743 = vpack.c.b16 %v991, %v983
    %v1744 = vpack.c.b16 %v992, %v984
    %v1745 = vpack.c.b16 %v993, %v985
    %v1746 = vpack.c.b16 %v994, %v986
    %v1747 = vpack.c.b16 %v1003, %v995
    %v1748 = vpack.c.b16 %v1004, %v996
    %v1749 = vpack.c.b16 %v1005, %v997
    %v1750 = vpack.c.b16 %v1006, %v998
    %v1751 = vpack.c.b16 %v1007, %v999
    %v1752 = vpack.c.b16 %v1008, %v1000
    %v1753 = vpack.c.b16 %v1009, %v1001
    %v1754 = vpack.c.b16 %v1010, %v1002
    %v1755 = vpack.c.b16 %v1019, %v1011
    %v1756 = vpack.c.b16 %v1020, %v1012
    %v1757 = vpack.c.b16 %v1021, %v1013
    %v1758 = vpack.c.b16 %v1022, %v1014
    %v1759 = vpack.c.b16 %v1023, %v1015
    %v1760 = vpack.c.b16 %v1024, %v1016
    %v1761 = vpack.c.b16 %v1025, %v1017
    %v1762 = vpack.c.b16 %v1026, %v1018
    %v1763 = vpack.c.b16 %v1035, %v1027
    %v1764 = vpack.c.b16 %v1036, %v1028
    %v1765 = vpack.c.b16 %v1037, %v1029
    %v1766 = vpack.c.b16 %v1038, %v1030
    %v1767 = vpack.c.b16 %v1039, %v1031
    %v1768 = vpack.c.b16 %v1040, %v1032
    %v1769 = vpack.c.b16 %v1041, %v1033
    %v1770 = vpack.c.b16 %v1042, %v1034
    %v1771 = vpack.c.b16 %v1051, %v1043
    %v1772 = vpack.c.b16 %v1052, %v1044
    %v1773 = vpack.c.b16 %v1053, %v1045
    %v1774 = vpack.c.b16 %v1054, %v1046
    %v1775 = vpack.c.b16 %v1055, %v1047
    %v1776 = vpack.c.b16 %v1056, %v1048
    %v1777 = vpack.c.b16 %v1057, %v1049
    %v1778 = vpack.c.b16 %v1058, %v1050
    %v1779 = vpack.c.b16 %v1067, %v1059
    %v1780 = vpack.c.b16 %v1068, %v1060
    %v1781 = vpack.c.b16 %v1069, %v1061
    %v1782 = vpack.c.b16 %v1070, %v1062
    %v1783 = vpack.c.b16 %v1071, %v1063
    %v1784 = vpack.c.b16 %v1072, %v1064
    %v1785 = vpack.c.b16 %v1073, %v1065
    %v1786 = vpack.c.b16 %v1074, %v1066
    %v1787 = vpack.c.b16 %v1083, %v1075
    %v1788 = vpack.c.b16 %v1084, %v1076
    %v1789 = vpack.c.b16 %v1085, %v1077
    %v1790 = vpack.c.b16 %v1086, %v1078
    %v1791 = vpack.c.b16 %v1087, %v1079
    %v1792 = vpack.c.b16 %v1088, %v1080
    %v1793 = vpack.c.b16 %v1089, %v1081
    %v1794 = vpack.c.b16 %v1090, %v1082
    %v1795 = vpack.c.b16 %v1099, %v1091
    %v1796 = vpack.c.b16 %v1100, %v1092
    %v1797 = vpack.c.b16 %v1101, %v1093
    %v1798 = vpack.c.b16 %v1102, %v1094
    %v1799 = vpack.c.b16 %v1103, %v1095
    %v1800 = vpack.c.b16 %v1104, %v1096
    %v1801 = vpack.c.b16 %v1105, %v1097
    %v1802 = vpack.c.b16 %v1106, %v1098
    %v1803 = vpack.c.b16 %v1115, %v1107
    %v1804 = vpack.c.b16 %v1116, %v1108
    %v1805 = vpack.c.b16 %v1117, %v1109
    %v1806 = vpack.c.b16 %v1118, %v1110
    %v1807 = vpack.c.b16 %v1119, %v1111
    %v1808 = vpack.c.b16 %v1120, %v1112
    %v1809 = vpack.c.b16 %v1121, %v1113
    %v1810 = vpack.c.b16 %v1122, %v1114
    %v1811 = vpack.c.b16 %v1131, %v1123
    %v1812 = vpack.c.b16 %v1132, %v1124
    %v1813 = vpack.c.b16 %v1133, %v1125
    %v1814 = vpack.c.b16 %v1134, %v1126
    %v1815 = vpack.c.b16 %v1135, %v1127
    %v1816 = vpack.c.b16 %v1136, %v1128
    %v1817 = vpack.c.b16 %v1137, %v1129
    %v1818 = vpack.c.b16 %v1138, %v1130
    %v1819 = vpack.c.b16 %v1147, %v1139
    %v1820 = vpack.c.b16 %v1148, %v1140
    %v1821 = vpack.c.b16 %v1149, %v1141
    %v1822 = vpack.c.b16 %v1150, %v1142
    %v1823 = vpack.c.b16 %v1151, %v1143
    %v1824 = vpack.c.b16 %v1152, %v1144
    %v1825 = vpack.c.b16 %v1153, %v1145
    %v1826 = vpack.c.b16 %v1154, %v1146
    %v1827 = vpack.c.b16 %v1163, %v1155
    %v1828 = vpack.c.b16 %v1164, %v1156
    %v1829 = vpack.c.b16 %v1165, %v1157
    %v1830 = vpack.c.b16 %v1166, %v1158
    %v1831 = vpack.c.b16 %v1167, %v1159
    %v1832 = vpack.c.b16 %v1168, %v1160
    %v1833 = vpack.c.b16 %v1169, %v1161
    %v1834 = vpack.c.b16 %v1170, %v1162
    %v1835 = vpack.c.b16 %v1179, %v1171
    %v1836 = vpack.c.b16 %v1180, %v1172
    %v1837 = vpack.c.b16 %v1181, %v1173
    %v1838 = vpack.c.b16 %v1182, %v1174
    %v1839 = vpack.c.b16 %v1183, %v1175
    %v1840 = vpack.c.b16 %v1184, %v1176
    %v1841 = vpack.c.b16 %v1185, %v1177
    %v1842 = vpack.c.b16 %v1186, %v1178
    %v1843 = vpack.c.b16 %v1195, %v1187
    %v1844 = vpack.c.b16 %v1196, %v1188
    %v1845 = vpack.c.b16 %v1197, %v1189
    %v1846 = vpack.c.b16 %v1198, %v1190
    %v1847 = vpack.c.b16 %v1199, %v1191
    %v1848 = vpack.c.b16 %v1200, %v1192
    %v1849 = vpack.c.b16 %v1201, %v1193
    %v1850 = vpack.c.b16 %v1202, %v1194
    %v1851 = vpack.c.b16 %v1211, %v1203
    %v1852 = vpack.c.b16 %v1212, %v1204
    %v1853 = vpack.c.b16 %v1213, %v1205
    %v1854 = vpack.c.b16 %v1214, %v1206
    %v1855 = vpack.c.b16 %v1215, %v1207
    %v1856 = vpack.c.b16 %v1216, %v1208
    %v1857 = vpack.c.b16 %v1217, %v1209
    %v1858 = vpack.c.b16 %v1218, %v1210
    %v1859 = vpack.c.b16 %v1227, %v1219
    %v1860 = vpack.c.b16 %v1228, %v1220
    %v1861 = vpack.c.b16 %v1229, %v1221
    %v1862 = vpack.c.b16 %v1230, %v1222
    %v1863 = vpack.c.b16 %v1231, %v1223
    %v1864 = vpack.c.b16 %v1232, %v1224
    %v1865 = vpack.c.b16 %v1233, %v1225
    %v1866 = vpack.c.b16 %v1234, %v1226
    %v1867 = vpack.c.b16 %v1243, %v1235
    %v1868 = vpack.c.b16 %v1244, %v1236
    %v1869 = vpack.c.b16 %v1245, %v1237
    %v1870 = vpack.c.b16 %v1246, %v1238
    %v1871 = vpack.c.b16 %v1247, %v1239
    %v1872 = vpack.c.b16 %v1248, %v1240
    %v1873 = vpack.c.b16 %v1249, %v1241
    %v1874 = vpack.c.b16 %v1250, %v1242
    %v1875 = vpack.c.b16 %v1259, %v1251
    %v1876 = vpack.c.b16 %v1260, %v1252
    %v1877 = vpack.c.b16 %v1261, %v1253
    %v1878 = vpack.c.b16 %v1262, %v1254
    %v1879 = vpack.c.b16 %v1263, %v1255
    %v1880 = vpack.c.b16 %v1264, %v1256
    %v1881 = vpack.c.b16 %v1265, %v1257
    %v1882 = vpack.c.b16 %v1266, %v1258
    %v1883 = vpack.c.b16 %v1275, %v1267
    %v1884 = vpack.c.b16 %v1276, %v1268
    %v1885 = vpack.c.b16 %v1277, %v1269
    %v1886 = vpack.c.b16 %v1278, %v1270
    %v1887 = vpack.c.b16 %v1279, %v1271
    %v1888 = vpack.c.b16 %v1280, %v1272
    %v1889 = vpack.c.b16 %v1281, %v1273
    %v1890 = vpack.c.b16 %v1282, %v1274
    %v1891 = vpack.c.b16 %v1291, %v1283
    %v1892 = vpack.c.b16 %v1292, %v1284
    %v1893 = vpack.c.b16 %v1293, %v1285
    %v1894 = vpack.c.b16 %v1294, %v1286
    %v1895 = vpack.c.b16 %v1295, %v1287
    %v1896 = vpack.c.b16 %v1296, %v1288
    %v1897 = vpack.c.b16 %v1297, %v1289
    %v1898 = vpack.c.b16 %v1298, %v1290
    %v1899 = vpack.c.b16 %v1307, %v1299
    %v1900 = vpack.c.b16 %v1308, %v1300
    %v1901 = vpack.c.b16 %v1309, %v1301
    %v1902 = vpack.c.b16 %v1310, %v1302
    %v1903 = vpack.c.b16 %v1311, %v1303
    %v1904 = vpack.c.b16 %v1312, %v1304
    %v1905 = vpack.c.b16 %v1313, %v1305
    %v1906 = vpack.c.b16 %v1314, %v1306
    %v1907 = vpack.c.b16 %v1323, %v1315
    %v1908 = vpack.c.b16 %v1324, %v1316
    %v1909 = vpack.c.b16 %v1325, %v1317
    %v1910 = vpack.c.b16 %v1326, %v1318
    %v1911 = vpack.c.b16 %v1327, %v1319
    %v1912 = vpack.c.b16 %v1328, %v1320
    %v1913 = vpack.c.b16 %v1329, %v1321
    %v1914 = vpack.c.b16 %v1330, %v1322
    %v1915 = vpack.c.b16 %v1339, %v1331
    %v1916 = vpack.c.b16 %v1340, %v1332
    %v1917 = vpack.c.b16 %v1341, %v1333
    %v1918 = vpack.c.b16 %v1342, %v1334
    %v1919 = vpack.c.b16 %v1343, %v1335
    %v1920 = vpack.c.b16 %v1344, %v1336
    %v1921 = vpack.c.b16 %v1345, %v1337
    %v1922 = vpack.c.b16 %v1346, %v1338
    %v1923 = vpack.c.b16 %v1355, %v1347
    %v1924 = vpack.c.b16 %v1356, %v1348
    %v1925 = vpack.c.b16 %v1357, %v1349
    %v1926 = vpack.c.b16 %v1358, %v1350
    %v1927 = vpack.c.b16 %v1359, %v1351
    %v1928 = vpack.c.b16 %v1360, %v1352
    %v1929 = vpack.c.b16 %v1361, %v1353
    %v1930 = vpack.c.b16 %v1362, %v1354
    %v1931 = vpack.c.b16 %v1371, %v1363
    %v1932 = vpack.c.b16 %v1372, %v1364
    %v1933 = vpack.c.b16 %v1373, %v1365
    %v1934 = vpack.c.b16 %v1374, %v1366
    %v1935 = vpack.c.b16 %v1375, %v1367
    %v1936 = vpack.c.b16 %v1376, %v1368
    %v1937 = vpack.c.b16 %v1377, %v1369
    %v1938 = vpack.c.b16 %v1378, %v1370
    %v1939 = vpack.c.b16 %v1387, %v1379
    %v1940 = vpack.c.b16 %v1388, %v1380
    %v1941 = vpack.c.b16 %v1389, %v1381
    %v1942 = vpack.c.b16 %v1390, %v1382
    %v1943 = vpack.c.b16 %v1391, %v1383
    %v1944 = vpack.c.b16 %v1392, %v1384
    %v1945 = vpack.c.b16 %v1393, %v1385
    %v1946 = vpack.c.b16 %v1394, %v1386
    %v1947 = vpack.c.b16 %v1403, %v1395
    %v1948 = vpack.c.b16 %v1404, %v1396
    %v1949 = vpack.c.b16 %v1405, %v1397
    %v1950 = vpack.c.b16 %v1406, %v1398
    %v1951 = vpack.c.b16 %v1407, %v1399
    %v1952 = vpack.c.b16 %v1408, %v1400
    %v1953 = vpack.c.b16 %v1409, %v1401
    %v1954 = vpack.c.b16 %v1410, %v1402
    %v1955 = vpack.c.b16 %v1419, %v1411
    %v1956 = vpack.c.b16 %v1420, %v1412
    %v1957 = vpack.c.b16 %v1421, %v1413
    %v1958 = vpack.c.b16 %v1422, %v1414
    %v1959 = vpack.c.b16 %v1423, %v1415
    %v1960 = vpack.c.b16 %v1424, %v1416
    %v1961 = vpack.c.b16 %v1425, %v1417
    %v1962 = vpack.c.b16 %v1426, %v1418
    %v1963 = vpack.c.b16 %v1435, %v1427
    %v1964 = vpack.c.b16 %v1436, %v1428
    %v1965 = vpack.c.b16 %v1437, %v1429
    %v1966 = vpack.c.b16 %v1438, %v1430
    %v1967 = vpack.c.b16 %v1439, %v1431
    %v1968 = vpack.c.b16 %v1440, %v1432
    %v1969 = vpack.c.b16 %v1441, %v1433
    %v1970 = vpack.c.b16 %v1442, %v1434
    %v1971 = vpack.c.b16 %v1451, %v1443
    %v1972 = vpack.c.b16 %v1452, %v1444
    %v1973 = vpack.c.b16 %v1453, %v1445
    %v1974 = vpack.c.b16 %v1454, %v1446
    %v1975 = vpack.c.b16 %v1455, %v1447
    %v1976 = vpack.c.b16 %v1456, %v1448
    %v1977 = vpack.c.b16 %v1457, %v1449
    %v1978 = vpack.c.b16 %v1458, %v1450
    %v1979 = vpack.c.b16 %v1467, %v1459
    %v1980 = vpack.c.b16 %v1468, %v1460
    %v1981 = vpack.c.b16 %v1469, %v1461
    %v1982 = vpack.c.b16 %v1470, %v1462
    %v1983 = vpack.c.b16 %v1471, %v1463
    %v1984 = vpack.c.b16 %v1472, %v1464
    %v1985 = vpack.c.b16 %v1473, %v1465
    %v1986 = vpack.c.b16 %v1474, %v1466
    %v1987 = vpack.c.b16 %v1483, %v1475
    %v1988 = vpack.c.b16 %v1484, %v1476
    %v1989 = vpack.c.b16 %v1485, %v1477
    %v1990 = vpack.c.b16 %v1486, %v1478
    %v1991 = vpack.c.b16 %v1487, %v1479
    %v1992 = vpack.c.b16 %v1488, %v1480
    %v1993 = vpack.c.b16 %v1489, %v1481
    %v1994 = vpack.c.b16 %v1490, %v1482
    %v1995 = vpack.c.b16 %v1499, %v1491
    %v1996 = vpack.c.b16 %v1500, %v1492
    %v1997 = vpack.c.b16 %v1501, %v1493
    %v1998 = vpack.c.b16 %v1502, %v1494
    %v1999 = vpack.c.b16 %v1503, %v1495
    %v2000 = vpack.c.b16 %v1504, %v1496
    %v2001 = vpack.c.b16 %v1505, %v1497
    %v2002 = vpack.c.b16 %v1506, %v1498
    %v2003 = vpack.c.b16 %v1515, %v1507
    %v2004 = vpack.c.b16 %v1516, %v1508
    %v2005 = vpack.c.b16 %v1517, %v1509
    %v2006 = vpack.c.b16 %v1518, %v1510
    %v2007 = vpack.c.b16 %v1519, %v1511
    %v2008 = vpack.c.b16 %v1520, %v1512
    %v2009 = vpack.c.b16 %v1521, %v1513
    %v2010 = vpack.c.b16 %v1522, %v1514
    %v2011 = vpack.c.b16 %v1531, %v1523
    %v2012 = vpack.c.b16 %v1532, %v1524
    %v2013 = vpack.c.b16 %v1533, %v1525
    %v2014 = vpack.c.b16 %v1534, %v1526
    %v2015 = vpack.c.b16 %v1535, %v1527
    %v2016 = vpack.c.b16 %v1536, %v1528
    %v2017 = vpack.c.b16 %v1537, %v1529
    %v2018 = vpack.c.b16 %v1538, %v1530
    %v2019 = vpack.c.b16 %v1547, %v1539
    %v2020 = vpack.c.b16 %v1548, %v1540
    %v2021 = vpack.c.b16 %v1549, %v1541
    %v2022 = vpack.c.b16 %v1550, %v1542
    %v2023 = vpack.c.b16 %v1551, %v1543
    %v2024 = vpack.c.b16 %v1552, %v1544
    %v2025 = vpack.c.b16 %v1553, %v1545
    %v2026 = vpack.c.b16 %v1554, %v1546
    %v2027 = vpack.c.b16 %v1563, %v1555
    %v2028 = vpack.c.b16 %v1564, %v1556
    %v2029 = vpack.c.b16 %v1565, %v1557
    %v2030 = vpack.c.b16 %v1566, %v1558
    %v2031 = vpack.c.b16 %v1567, %v1559
    %v2032 = vpack.c.b16 %v1568, %v1560
    %v2033 = vpack.c.b16 %v1569, %v1561
    %v2034 = vpack.c.b16 %v1570, %v1562
    %v2035 = vpack.c.b16 %v1579, %v1571
    %v2036 = vpack.c.b16 %v1580, %v1572
    %v2037 = vpack.c.b16 %v1581, %v1573
    %v2038 = vpack.c.b16 %v1582, %v1574
    %v2039 = vpack.c.b16 %v1583, %v1575
    %v2040 = vpack.c.b16 %v1584, %v1576
    %v2041 = vpack.c.b16 %v1585, %v1577
    %v2042 = vpack.c.b16 %v1586, %v1578
    %v2043 = vpack.c.b16 %v1595, %v1587
    %v2044 = vpack.c.b16 %v1596, %v1588
    %v2045 = vpack.c.b16 %v1597, %v1589
    %v2046 = vpack.c.b16 %v1598, %v1590
    %v2047 = vpack.c.b16 %v1599, %v1591
    %v2048 = vpack.c.b16 %v1600, %v1592
    %v2049 = vpack.c.b16 %v1601, %v1593
    %v2050 = vpack.c.b16 %v1602, %v1594
    %v2051 = vpack.c.b16 %v1611, %v1603
    %v2052 = vpack.c.b16 %v1612, %v1604
    %v2053 = vpack.c.b16 %v1613, %v1605
    %v2054 = vpack.c.b16 %v1614, %v1606
    %v2055 = vpack.c.b16 %v1615, %v1607
    %v2056 = vpack.c.b16 %v1616, %v1608
    %v2057 = vpack.c.b16 %v1617, %v1609
    %v2058 = vpack.c.b16 %v1618, %v1610
    %v2059 = vpack.c.b16 %v1627, %v1619
    %v2060 = vpack.c.b16 %v1628, %v1620
    %v2061 = vpack.c.b16 %v1629, %v1621
    %v2062 = vpack.c.b16 %v1630, %v1622
    %v2063 = vpack.c.b16 %v1631, %v1623
    %v2064 = vpack.c.b16 %v1632, %v1624
    %v2065 = vpack.c.b16 %v1633, %v1625
    %v2066 = vpack.c.b16 %v1634, %v1626
    %v2067 = vpack.c.b16 %v1643, %v1635
    %v2068 = vpack.c.b16 %v1644, %v1636
    %v2069 = vpack.c.b16 %v1645, %v1637
    %v2070 = vpack.c.b16 %v1646, %v1638
    %v2071 = vpack.c.b16 %v1647, %v1639
    %v2072 = vpack.c.b16 %v1648, %v1640
    %v2073 = vpack.c.b16 %v1649, %v1641
    %v2074 = vpack.c.b16 %v1650, %v1642
    %v2075 = vpack.c.b16 %v1659, %v1651
    %v2076 = vpack.c.b16 %v1660, %v1652
    %v2077 = vpack.c.b16 %v1661, %v1653
    %v2078 = vpack.c.b16 %v1662, %v1654
    %v2079 = vpack.c.b16 %v1663, %v1655
    %v2080 = vpack.c.b16 %v1664, %v1656
    %v2081 = vpack.c.b16 %v1665, %v1657
    %v2082 = vpack.c.b16 %v1666, %v1658
    %v2083 = vpack.c.b16 %v1675, %v1667
    %v2084 = vpack.c.b16 %v1676, %v1668
    %v2085 = vpack.c.b16 %v1677, %v1669
    %v2086 = vpack.c.b16 %v1678, %v1670
    %v2087 = vpack.c.b16 %v1679, %v1671
    %v2088 = vpack.c.b16 %v1680, %v1672
    %v2089 = vpack.c.b16 %v1681, %v1673
    %v2090 = vpack.c.b16 %v1682, %v1674
    %v2091 = vpack.c.b16 %v1691, %v1683
    %v2092 = vpack.c.b16 %v1692, %v1684
    %v2093 = vpack.c.b16 %v1693, %v1685
    %v2094 = vpack.c.b16 %v1694, %v1686
    %v2095 = vpack.c.b16 %v1695, %v1687
    %v2096 = vpack.c.b16 %v1696, %v1688
    %v2097 = vpack.c.b16 %v1697, %v1689
    %v2098 = vpack.c.b16 %v1698, %v1690
    %v2099 = vpack.c.b16 %v1707, %v1699
    %v2100 = vpack.c.b16 %v1708, %v1700
    %v2101 = vpack.c.b16 %v1709, %v1701
    %v2102 = vpack.c.b16 %v1710, %v1702
    %v2103 = vpack.c.b16 %v1711, %v1703
    %v2104 = vpack.c.b16 %v1712, %v1704
    %v2105 = vpack.c.b16 %v1713, %v1705
    %v2106 = vpack.c.b16 %v1714, %v1706
    %vm2499 = vcmask 130048
    %v2501 = vsel %vm2499, %v104, 0
    %2503 = vmatprep.subr.bf16.mxu0 %v1716
    %2504 = vmatpush1.bf16.msra.mxu0 %v1715
    %2505 = vmatprep.subr.bf16.mxu0 %v1724
    %2506 = vmatpush1.bf16.msra.mxu0 %v1723
    %2507 = vmatprep.subr.bf16.mxu0 %v1732
    %2508 = vmatpush1.bf16.msra.mxu0 %v1731
    %2509 = vmatprep.subr.bf16.mxu0 %v1740
    %2510 = vmatpush1.bf16.msra.mxu0 %v1739
    %2511 = vmatprep.subr.bf16.mxu0 %v1748
    %2512 = vmatpush1.bf16.msra.mxu0 %v1747
    %2513 = vmatprep.subr.bf16.mxu0 %v1756
    %2514 = vmatpush1.bf16.msra.mxu0 %v1755
    %2515 = vmatprep.subr.bf16.mxu0 %v1764
    %2516 = vmatpush1.bf16.msra.mxu0 %v1763
    %2517 = vmatprep.subr.bf16.mxu0 %v1772
    %2518 = vmatpush1.bf16.msra.mxu0 %v1771
    %2519 = vmatprep.subr.bf16.mxu0 %v1780
    %2520 = vmatpush1.bf16.msra.mxu0 %v1779
    %2521 = vmatprep.subr.bf16.mxu0 %v1788
    %2522 = vmatpush1.bf16.msra.mxu0 %v1787
    %2523 = vmatprep.subr.bf16.mxu0 %v1796
    %2524 = vmatpush1.bf16.msra.mxu0 %v1795
    %2525 = vmatprep.subr.bf16.mxu0 %v1804
    %2526 = vmatpush1.bf16.msra.mxu0 %v1803
    %2527 = vmatprep.subr.bf16.mxu0 %v1812
    %2528 = vmatpush1.bf16.msra.mxu0 %v1811
    %2529 = vmatprep.subr.bf16.mxu0 %v1820
    %2530 = vmatpush1.bf16.msra.mxu0 %v1819
    %2531 = vmatprep.subr.bf16.mxu0 %v1828
    %2532 = vmatpush1.bf16.msra.mxu0 %v1827
    %2533 = vmatprep.subr.bf16.mxu0 %v1836
    %2534 = vmatpush1.bf16.msra.mxu0 %v1835
    %2535 = vmatprep.mubr.bf16.mxu0 %v99
    %2536 = vmatmul.mubr.bf16.gmra.mrb[0].mxu0 %v98
    %v2537 = vpop.f32.mrb[0].mxu0
    %v2538 = vadd.f32 %v502, %v2537
    %v2539 = vpop.f32.mrb[0].mxu0
    %v2540 = vadd.f32 %v506, %v2539
    %v2541 = vpop.f32.mrb[0].mxu0
    %v2542 = vpop.f32.mrb[0].mxu0
    %2543 = vdwg.mxu0
    %2544 = vmatprep.subr.bf16.mxu0 %v1844
    %2545 = vmatpush1.bf16.msra.mxu0 %v1843
    %2546 = vmatprep.subr.bf16.mxu0 %v1852
    %2547 = vmatpush1.bf16.msra.mxu0 %v1851
    %2548 = vmatprep.subr.bf16.mxu0 %v1860
    %2549 = vmatpush1.bf16.msra.mxu0 %v1859
    %2550 = vmatprep.subr.bf16.mxu0 %v1868
    %2551 = vmatpush1.bf16.msra.mxu0 %v1867
    %2552 = vmatprep.subr.bf16.mxu0 %v1876
    %2553 = vmatpush1.bf16.msra.mxu0 %v1875
    %2554 = vmatprep.subr.bf16.mxu0 %v1884
    %2555 = vmatpush1.bf16.msra.mxu0 %v1883
    %2556 = vmatprep.subr.bf16.mxu0 %v1892
    %2557 = vmatpush1.bf16.msra.mxu0 %v1891
    %2558 = vmatprep.subr.bf16.mxu0 %v1900
    %2559 = vmatpush1.bf16.msra.mxu0 %v1899
    %2560 = vmatprep.subr.bf16.mxu0 %v1908
    %2561 = vmatpush1.bf16.msra.mxu0 %v1907
    %2562 = vmatprep.subr.bf16.mxu0 %v1916
    %2563 = vmatpush1.bf16.msra.mxu0 %v1915
    %2564 = vmatprep.subr.bf16.mxu0 %v1924
    %2565 = vmatpush1.bf16.msra.mxu0 %v1923
    %2566 = vmatprep.subr.bf16.mxu0 %v1932
    %2567 = vmatpush1.bf16.msra.mxu0 %v1931
    %2568 = vmatprep.subr.bf16.mxu0 %v1940
    %2569 = vmatpush1.bf16.msra.mxu0 %v1939
    %2570 = vmatprep.subr.bf16.mxu0 %v1948
    %2571 = vmatpush1.bf16.msra.mxu0 %v1947
    %2572 = vmatprep.subr.bf16.mxu0 %v1956
    %2573 = vmatpush1.bf16.msra.mxu0 %v1955
    %2574 = vmatprep.subr.bf16.mxu0 %v1964
    %2575 = vmatpush1.bf16.msra.mxu0 %v1963
    %2576 = vmatprep.mubr.bf16.mxu0 %v101
    %2577 = vmatmul.mubr.bf16.gmra.mrb[0].mxu0 %v100
    %v2578 = vpop.f32.mrb[0].mxu0
    %v2579 = vadd.f32 %v2538, %v2578
    %v2580 = vpop.f32.mrb[0].mxu0
    %v2581 = vadd.f32 %v2540, %v2580
    %v2582 = vpop.f32.mrb[0].mxu0
    %v2583 = vpop.f32.mrb[0].mxu0
    %2584 = vdwg.mxu0
    %2585 = vmatprep.subr.bf16.mxu0 %v1972
    %2586 = vmatpush1.bf16.msra.mxu0 %v1971
    %2587 = vmatprep.subr.bf16.mxu0 %v1980
    %2588 = vmatpush1.bf16.msra.mxu0 %v1979
    %2589 = vmatprep.subr.bf16.mxu0 %v1988
    %2590 = vmatpush1.bf16.msra.mxu0 %v1987
    %2591 = vmatprep.subr.bf16.mxu0 %v1996
    %2592 = vmatpush1.bf16.msra.mxu0 %v1995
    %2593 = vmatprep.subr.bf16.mxu0 %v2004
    %2594 = vmatpush1.bf16.msra.mxu0 %v2003
    %2595 = vmatprep.subr.bf16.mxu0 %v2012
    %2596 = vmatpush1.bf16.msra.mxu0 %v2011
    %2597 = vmatprep.subr.bf16.mxu0 %v2020
    %2598 = vmatpush1.bf16.msra.mxu0 %v2019
    %2599 = vmatprep.subr.bf16.mxu0 %v2028
    %2600 = vmatpush1.bf16.msra.mxu0 %v2027
    %2601 = vmatprep.subr.bf16.mxu0 %v2036
    %2602 = vmatpush1.bf16.msra.mxu0 %v2035
    %2603 = vmatprep.subr.bf16.mxu0 %v2044
    %2604 = vmatpush1.bf16.msra.mxu0 %v2043
    %2605 = vmatprep.subr.bf16.mxu0 %v2052
    %2606 = vmatpush1.bf16.msra.mxu0 %v2051
    %2607 = vmatprep.subr.bf16.mxu0 %v2060
    %2608 = vmatpush1.bf16.msra.mxu0 %v2059
    %2609 = vmatprep.subr.bf16.mxu0 %v2068
    %2610 = vmatpush1.bf16.msra.mxu0 %v2067
    %2611 = vmatprep.subr.bf16.mxu0 %v2076
    %2612 = vmatpush1.bf16.msra.mxu0 %v2075
    %2613 = vmatprep.subr.bf16.mxu0 %v2084
    %2614 = vmatpush1.bf16.msra.mxu0 %v2083
    %2615 = vmatprep.subr.bf16.mxu0 %v2092
    %2616 = vmatpush1.bf16.msra.mxu0 %v2091
    %2617 = vmatprep.mubr.bf16.mxu0 %v103
    %2618 = vmatmul.mubr.bf16.gmra.mrb[0].mxu0 %v102
    %v2619 = vpop.f32.mrb[0].mxu0
    %v2620 = vadd.f32 %v2579, %v2619
    %v2621 = vpop.f32.mrb[0].mxu0
    %v2622 = vadd.f32 %v2581, %v2621
    %v2623 = vpop.f32.mrb[0].mxu0
    %v2624 = vpop.f32.mrb[0].mxu0
    %2625 = vdwg.mxu0
    %2626 = vmatprep.subr.bf16.mxu0 %v2100
    %2627 = vmatpush1.bf16.msra.mxu0 %v2099
    %2628 = vmatprep.subr.bf16.mxu0 0
    %2629 = vmatpush1.bf16.msra.mxu0 0
    %2630 = vmatprep.subr.bf16.mxu0 0
    %2631 = vmatpush1.bf16.msra.mxu0 0
    %2632 = vmatprep.subr.bf16.mxu0 0
    %2633 = vmatpush1.bf16.msra.mxu0 0
    %2634 = vmatprep.subr.bf16.mxu0 0
    %2635 = vmatpush1.bf16.msra.mxu0 0
    %2636 = vmatprep.subr.bf16.mxu0 0
    %2637 = vmatpush1.bf16.msra.mxu0 0
    %2638 = vmatprep.subr.bf16.mxu0 0
    %2639 = vmatpush1.bf16.msra.mxu0 0
    %2640 = vmatprep.subr.bf16.mxu0 0
    %2641 = vmatpush1.bf16.msra.mxu0 0
    %2642 = vmatprep.subr.bf16.mxu0 0
    %2643 = vmatpush1.bf16.msra.mxu0 0
    %2644 = vmatprep.subr.bf16.mxu0 0
    %2645 = vmatpush1.bf16.msra.mxu0 0
    %2646 = vmatprep.subr.bf16.mxu0 0
    %2647 = vmatpush1.bf16.msra.mxu0 0
    %2648 = vmatprep.subr.bf16.mxu0 0
    %2649 = vmatpush1.bf16.msra.mxu0 0
    %2650 = vmatprep.subr.bf16.mxu0 0
    %2651 = vmatpush1.bf16.msra.mxu0 0
    %2652 = vmatprep.subr.bf16.mxu0 0
    %2653 = vmatpush1.bf16.msra.mxu0 0
    %2654 = vmatprep.subr.bf16.mxu0 0
    %2655 = vmatpush1.bf16.msra.mxu0 0
    %2656 = vmatprep.subr.bf16.mxu0 0
    %2657 = vmatpush1.bf16.msra.mxu0 0
    %2658 = vmatprep.mubr.bf16.mxu0 0
    %2659 = vmatmul.mubr.bf16.gmra.mrb[0].mxu0 %v2501
    %v2660 = vpop.f32.mrb[0].mxu0
    %v2661 = vadd.f32 %v2620, %v2660
    %v2662 = vpop.f32.mrb[0].mxu0
    %v2663 = vadd.f32 %v2622, %v2662
    %v2664 = vpop.f32.mrb[0].mxu0
    %v2665 = vpop.f32.mrb[0].mxu0
    %2666 = vdwg.mxu0
    %2667 = vmatprep.subr.bf16.mxu0 %v1718
    %2668 = vmatpush1.bf16.msra.mxu0 %v1717
    %2669 = vmatprep.subr.bf16.mxu0 %v1726
    %2670 = vmatpush1.bf16.msra.mxu0 %v1725
    %2671 = vmatprep.subr.bf16.mxu0 %v1734
    %2672 = vmatpush1.bf16.msra.mxu0 %v1733
    %2673 = vmatprep.subr.bf16.mxu0 %v1742
    %2674 = vmatpush1.bf16.msra.mxu0 %v1741
    %2675 = vmatprep.subr.bf16.mxu0 %v1750
    %2676 = vmatpush1.bf16.msra.mxu0 %v1749
    %2677 = vmatprep.subr.bf16.mxu0 %v1758
    %2678 = vmatpush1.bf16.msra.mxu0 %v1757
    %2679 = vmatprep.subr.bf16.mxu0 %v1766
    %2680 = vmatpush1.bf16.msra.mxu0 %v1765
    %2681 = vmatprep.subr.bf16.mxu0 %v1774
    %2682 = vmatpush1.bf16.msra.mxu0 %v1773
    %2683 = vmatprep.subr.bf16.mxu0 %v1782
    %2684 = vmatpush1.bf16.msra.mxu0 %v1781
    %2685 = vmatprep.subr.bf16.mxu0 %v1790
    %2686 = vmatpush1.bf16.msra.mxu0 %v1789
    %2687 = vmatprep.subr.bf16.mxu0 %v1798
    %2688 = vmatpush1.bf16.msra.mxu0 %v1797
    %2689 = vmatprep.subr.bf16.mxu0 %v1806
    %2690 = vmatpush1.bf16.msra.mxu0 %v1805
    %2691 = vmatprep.subr.bf16.mxu0 %v1814
    %2692 = vmatpush1.bf16.msra.mxu0 %v1813
    %2693 = vmatprep.subr.bf16.mxu0 %v1822
    %2694 = vmatpush1.bf16.msra.mxu0 %v1821
    %2695 = vmatprep.subr.bf16.mxu0 %v1830
    %2696 = vmatpush1.bf16.msra.mxu0 %v1829
    %2697 = vmatprep.subr.bf16.mxu0 %v1838
    %2698 = vmatpush1.bf16.msra.mxu0 %v1837
    %2699 = vmatprep.mubr.bf16.mxu0 %v99
    %2700 = vmatmul.mubr.bf16.gmra.mrb[0].mxu0 %v98
    %v2701 = vpop.f32.mrb[0].mxu0
    %v2702 = vadd.f32 %v510, %v2701
    %v2703 = vpop.f32.mrb[0].mxu0
    %v2704 = vadd.f32 %v514, %v2703
    %v2705 = vpop.f32.mrb[0].mxu0
    %v2706 = vpop.f32.mrb[0].mxu0
    %2707 = vdwg.mxu0
    %2708 = vmatprep.subr.bf16.mxu0 %v1846
    %2709 = vmatpush1.bf16.msra.mxu0 %v1845
    %2710 = vmatprep.subr.bf16.mxu0 %v1854
    %2711 = vmatpush1.bf16.msra.mxu0 %v1853
    %2712 = vmatprep.subr.bf16.mxu0 %v1862
    %2713 = vmatpush1.bf16.msra.mxu0 %v1861
    %2714 = vmatprep.subr.bf16.mxu0 %v1870
    %2715 = vmatpush1.bf16.msra.mxu0 %v1869
    %2716 = vmatprep.subr.bf16.mxu0 %v1878
    %2717 = vmatpush1.bf16.msra.mxu0 %v1877
    %2718 = vmatprep.subr.bf16.mxu0 %v1886
    %2719 = vmatpush1.bf16.msra.mxu0 %v1885
    %2720 = vmatprep.subr.bf16.mxu0 %v1894
    %2721 = vmatpush1.bf16.msra.mxu0 %v1893
    %2722 = vmatprep.subr.bf16.mxu0 %v1902
    %2723 = vmatpush1.bf16.msra.mxu0 %v1901
    %2724 = vmatprep.subr.bf16.mxu0 %v1910
    %2725 = vmatpush1.bf16.msra.mxu0 %v1909
    %2726 = vmatprep.subr.bf16.mxu0 %v1918
    %2727 = vmatpush1.bf16.msra.mxu0 %v1917
    %2728 = vmatprep.subr.bf16.mxu0 %v1926
    %2729 = vmatpush1.bf16.msra.mxu0 %v1925
    %2730 = vmatprep.subr.bf16.mxu0 %v1934
    %2731 = vmatpush1.bf16.msra.mxu0 %v1933
    %2732 = vmatprep.subr.bf16.mxu0 %v1942
    %2733 = vmatpush1.bf16.msra.mxu0 %v1941
    %2734 = vmatprep.subr.bf16.mxu0 %v1950
    %2735 = vmatpush1.bf16.msra.mxu0 %v1949
    %2736 = vmatprep.subr.bf16.mxu0 %v1958
    %2737 = vmatpush1.bf16.msra.mxu0 %v1957
    %2738 = vmatprep.subr.bf16.mxu0 %v1966
    %2739 = vmatpush1.bf16.msra.mxu0 %v1965
    %2740 = vmatprep.mubr.bf16.mxu0 %v101
    %2741 = vmatmul.mubr.bf16.gmra.mrb[0].mxu0 %v100
    %v2742 = vpop.f32.mrb[0].mxu0
    %v2743 = vadd.f32 %v2702, %v2742
    %v2744 = vpop.f32.mrb[0].mxu0
    %v2745 = vadd.f32 %v2704, %v2744
    %v2746 = vpop.f32.mrb[0].mxu0
    %v2747 = vpop.f32.mrb[0].mxu0
    %2748 = vdwg.mxu0
    %2749 = vmatprep.subr.bf16.mxu0 %v1974
    %2750 = vmatpush1.bf16.msra.mxu0 %v1973
    %2751 = vmatprep.subr.bf16.mxu0 %v1982
    %2752 = vmatpush1.bf16.msra.mxu0 %v1981
    %2753 = vmatprep.subr.bf16.mxu0 %v1990
    %2754 = vmatpush1.bf16.msra.mxu0 %v1989
    %2755 = vmatprep.subr.bf16.mxu0 %v1998
    %2756 = vmatpush1.bf16.msra.mxu0 %v1997
    %2757 = vmatprep.subr.bf16.mxu0 %v2006
    %2758 = vmatpush1.bf16.msra.mxu0 %v2005
    %2759 = vmatprep.subr.bf16.mxu0 %v2014
    %2760 = vmatpush1.bf16.msra.mxu0 %v2013
    %2761 = vmatprep.subr.bf16.mxu0 %v2022
    %2762 = vmatpush1.bf16.msra.mxu0 %v2021
    %2763 = vmatprep.subr.bf16.mxu0 %v2030
    %2764 = vmatpush1.bf16.msra.mxu0 %v2029
    %2765 = vmatprep.subr.bf16.mxu0 %v2038
    %2766 = vmatpush1.bf16.msra.mxu0 %v2037
    %2767 = vmatprep.subr.bf16.mxu0 %v2046
    %2768 = vmatpush1.bf16.msra.mxu0 %v2045
    %2769 = vmatprep.subr.bf16.mxu0 %v2054
    %2770 = vmatpush1.bf16.msra.mxu0 %v2053
    %2771 = vmatprep.subr.bf16.mxu0 %v2062
    %2772 = vmatpush1.bf16.msra.mxu0 %v2061
    %2773 = vmatprep.subr.bf16.mxu0 %v2070
    %2774 = vmatpush1.bf16.msra.mxu0 %v2069
    %2775 = vmatprep.subr.bf16.mxu0 %v2078
    %2776 = vmatpush1.bf16.msra.mxu0 %v2077
    %2777 = vmatprep.subr.bf16.mxu0 %v2086
    %2778 = vmatpush1.bf16.msra.mxu0 %v2085
    %2779 = vmatprep.subr.bf16.mxu0 %v2094
    %2780 = vmatpush1.bf16.msra.mxu0 %v2093
    %2781 = vmatprep.mubr.bf16.mxu0 %v103
    %2782 = vmatmul.mubr.bf16.gmra.mrb[0].mxu0 %v102
    %v2783 = vpop.f32.mrb[0].mxu0
    %v2784 = vadd.f32 %v2743, %v2783
    %v2785 = vpop.f32.mrb[0].mxu0
    %v2786 = vadd.f32 %v2745, %v2785
    %v2787 = vpop.f32.mrb[0].mxu0
    %v2788 = vpop.f32.mrb[0].mxu0
    %2789 = vdwg.mxu0
    %2790 = vmatprep.subr.bf16.mxu0 %v2102
    %2791 = vmatpush1.bf16.msra.mxu0 %v2101
    %2792 = vmatprep.subr.bf16.mxu0 0
    %2793 = vmatpush1.bf16.msra.mxu0 0
    %2794 = vmatprep.subr.bf16.mxu0 0
    %2795 = vmatpush1.bf16.msra.mxu0 0
    %2796 = vmatprep.subr.bf16.mxu0 0
    %2797 = vmatpush1.bf16.msra.mxu0 0
    %2798 = vmatprep.subr.bf16.mxu0 0
    %2799 = vmatpush1.bf16.msra.mxu0 0
    %2800 = vmatprep.subr.bf16.mxu0 0
    %2801 = vmatpush1.bf16.msra.mxu0 0
    %2802 = vmatprep.subr.bf16.mxu0 0
    %2803 = vmatpush1.bf16.msra.mxu0 0
    %2804 = vmatprep.subr.bf16.mxu0 0
    %2805 = vmatpush1.bf16.msra.mxu0 0
    %2806 = vmatprep.subr.bf16.mxu0 0
    %2807 = vmatpush1.bf16.msra.mxu0 0
    %2808 = vmatprep.subr.bf16.mxu0 0
    %2809 = vmatpush1.bf16.msra.mxu0 0
    %2810 = vmatprep.subr.bf16.mxu0 0
    %2811 = vmatpush1.bf16.msra.mxu0 0
    %2812 = vmatprep.subr.bf16.mxu0 0
    %2813 = vmatpush1.bf16.msra.mxu0 0
    %2814 = vmatprep.subr.bf16.mxu0 0
    %2815 = vmatpush1.bf16.msra.mxu0 0
    %2816 = vmatprep.subr.bf16.mxu0 0
    %2817 = vmatpush1.bf16.msra.mxu0 0
    %2818 = vmatprep.subr.bf16.mxu0 0
    %2819 = vmatpush1.bf16.msra.mxu0 0
    %2820 = vmatprep.subr.bf16.mxu0 0
    %2821 = vmatpush1.bf16.msra.mxu0 0
    %2822 = vmatprep.mubr.bf16.mxu0 0
    %2823 = vmatmul.mubr.bf16.gmra.mrb[0].mxu0 %v2501
    %v2824 = vpop.f32.mrb[0].mxu0
    %v2825 = vadd.f32 %v2784, %v2824
    %v2826 = vpop.f32.mrb[0].mxu0
    %v2827 = vadd.f32 %v2786, %v2826
    %v2828 = vpop.f32.mrb[0].mxu0
    %v2829 = vpop.f32.mrb[0].mxu0
    %2830 = vdwg.mxu0
    %2831 = vmatprep.subr.bf16.mxu0 %v1720
    %2832 = vmatpush1.bf16.msra.mxu0 %v1719
    %2833 = vmatprep.subr.bf16.mxu0 %v1728
    %2834 = vmatpush1.bf16.msra.mxu0 %v1727
    %2835 = vmatprep.subr.bf16.mxu0 %v1736
    %2836 = vmatpush1.bf16.msra.mxu0 %v1735
    %2837 = vmatprep.subr.bf16.mxu0 %v1744
    %2838 = vmatpush1.bf16.msra.mxu0 %v1743
    %2839 = vmatprep.subr.bf16.mxu0 %v1752
    %2840 = vmatpush1.bf16.msra.mxu0 %v1751
    %2841 = vmatprep.subr.bf16.mxu0 %v1760
    %2842 = vmatpush1.bf16.msra.mxu0 %v1759
    %2843 = vmatprep.subr.bf16.mxu0 %v1768
    %2844 = vmatpush1.bf16.msra.mxu0 %v1767
    %2845 = vmatprep.subr.bf16.mxu0 %v1776
    %2846 = vmatpush1.bf16.msra.mxu0 %v1775
    %2847 = vmatprep.subr.bf16.mxu0 %v1784
    %2848 = vmatpush1.bf16.msra.mxu0 %v1783
    %2849 = vmatprep.subr.bf16.mxu0 %v1792
    %2850 = vmatpush1.bf16.msra.mxu0 %v1791
    %2851 = vmatprep.subr.bf16.mxu0 %v1800
    %2852 = vmatpush1.bf16.msra.mxu0 %v1799
    %2853 = vmatprep.subr.bf16.mxu0 %v1808
    %2854 = vmatpush1.bf16.msra.mxu0 %v1807
    %2855 = vmatprep.subr.bf16.mxu0 %v1816
    %2856 = vmatpush1.bf16.msra.mxu0 %v1815
    %2857 = vmatprep.subr.bf16.mxu0 %v1824
    %2858 = vmatpush1.bf16.msra.mxu0 %v1823
    %2859 = vmatprep.subr.bf16.mxu0 %v1832
    %2860 = vmatpush1.bf16.msra.mxu0 %v1831
    %2861 = vmatprep.subr.bf16.mxu0 %v1840
    %2862 = vmatpush1.bf16.msra.mxu0 %v1839
    %2863 = vmatprep.mubr.bf16.mxu0 %v99
    %2864 = vmatmul.mubr.bf16.gmra.mrb[0].mxu0 %v98
    %v2865 = vpop.f32.mrb[0].mxu0
    %v2866 = vadd.f32 %v518, %v2865
    %v2867 = vpop.f32.mrb[0].mxu0
    %v2868 = vadd.f32 %v522, %v2867
    %v2869 = vpop.f32.mrb[0].mxu0
    %v2870 = vpop.f32.mrb[0].mxu0
    %2871 = vdwg.mxu0
    %2872 = vmatprep.subr.bf16.mxu0 %v1848
    %2873 = vmatpush1.bf16.msra.mxu0 %v1847
    %2874 = vmatprep.subr.bf16.mxu0 %v1856
    %2875 = vmatpush1.bf16.msra.mxu0 %v1855
    %2876 = vmatprep.subr.bf16.mxu0 %v1864
    %2877 = vmatpush1.bf16.msra.mxu0 %v1863
    %2878 = vmatprep.subr.bf16.mxu0 %v1872
    %2879 = vmatpush1.bf16.msra.mxu0 %v1871
    %2880 = vmatprep.subr.bf16.mxu0 %v1880
    %2881 = vmatpush1.bf16.msra.mxu0 %v1879
    %2882 = vmatprep.subr.bf16.mxu0 %v1888
    %2883 = vmatpush1.bf16.msra.mxu0 %v1887
    %2884 = vmatprep.subr.bf16.mxu0 %v1896
    %2885 = vmatpush1.bf16.msra.mxu0 %v1895
    %2886 = vmatprep.subr.bf16.mxu0 %v1904
    %2887 = vmatpush1.bf16.msra.mxu0 %v1903
    %2888 = vmatprep.subr.bf16.mxu0 %v1912
    %2889 = vmatpush1.bf16.msra.mxu0 %v1911
    %2890 = vmatprep.subr.bf16.mxu0 %v1920
    %2891 = vmatpush1.bf16.msra.mxu0 %v1919
    %2892 = vmatprep.subr.bf16.mxu0 %v1928
    %2893 = vmatpush1.bf16.msra.mxu0 %v1927
    %2894 = vmatprep.subr.bf16.mxu0 %v1936
    %2895 = vmatpush1.bf16.msra.mxu0 %v1935
    %2896 = vmatprep.subr.bf16.mxu0 %v1944
    %2897 = vmatpush1.bf16.msra.mxu0 %v1943
    %2898 = vmatprep.subr.bf16.mxu0 %v1952
    %2899 = vmatpush1.bf16.msra.mxu0 %v1951
    %2900 = vmatprep.subr.bf16.mxu0 %v1960
    %2901 = vmatpush1.bf16.msra.mxu0 %v1959
    %2902 = vmatprep.subr.bf16.mxu0 %v1968
    %2903 = vmatpush1.bf16.msra.mxu0 %v1967
    %2904 = vmatprep.mubr.bf16.mxu0 %v101
    %2905 = vmatmul.mubr.bf16.gmra.mrb[0].mxu0 %v100
    %v2906 = vpop.f32.mrb[0].mxu0
    %v2907 = vadd.f32 %v2866, %v2906
    %v2908 = vpop.f32.mrb[0].mxu0
    %v2909 = vadd.f32 %v2868, %v2908
    %v2910 = vpop.f32.mrb[0].mxu0
    %v2911 = vpop.f32.mrb[0].mxu0
    %2912 = vdwg.mxu0
    %2913 = vmatprep.subr.bf16.mxu0 %v1976
    %2914 = vmatpush1.bf16.msra.mxu0 %v1975
    %2915 = vmatprep.subr.bf16.mxu0 %v1984
    %2916 = vmatpush1.bf16.msra.mxu0 %v1983
    %2917 = vmatprep.subr.bf16.mxu0 %v1992
    %2918 = vmatpush1.bf16.msra.mxu0 %v1991
    %2919 = vmatprep.subr.bf16.mxu0 %v2000
    %2920 = vmatpush1.bf16.msra.mxu0 %v1999
    %2921 = vmatprep.subr.bf16.mxu0 %v2008
    %2922 = vmatpush1.bf16.msra.mxu0 %v2007
    %2923 = vmatprep.subr.bf16.mxu0 %v2016
    %2924 = vmatpush1.bf16.msra.mxu0 %v2015
    %2925 = vmatprep.subr.bf16.mxu0 %v2024
    %2926 = vmatpush1.bf16.msra.mxu0 %v2023
    %2927 = vmatprep.subr.bf16.mxu0 %v2032
    %2928 = vmatpush1.bf16.msra.mxu0 %v2031
    %2929 = vmatprep.subr.bf16.mxu0 %v2040
    %2930 = vmatpush1.bf16.msra.mxu0 %v2039
    %2931 = vmatprep.subr.bf16.mxu0 %v2048
    %2932 = vmatpush1.bf16.msra.mxu0 %v2047
    %2933 = vmatprep.subr.bf16.mxu0 %v2056
    %2934 = vmatpush1.bf16.msra.mxu0 %v2055
    %2935 = vmatprep.subr.bf16.mxu0 %v2064
    %2936 = vmatpush1.bf16.msra.mxu0 %v2063
    %2937 = vmatprep.subr.bf16.mxu0 %v2072
    %2938 = vmatpush1.bf16.msra.mxu0 %v2071
    %2939 = vmatprep.subr.bf16.mxu0 %v2080
    %2940 = vmatpush1.bf16.msra.mxu0 %v2079
    %2941 = vmatprep.subr.bf16.mxu0 %v2088
    %2942 = vmatpush1.bf16.msra.mxu0 %v2087
    %2943 = vmatprep.subr.bf16.mxu0 %v2096
    %2944 = vmatpush1.bf16.msra.mxu0 %v2095
    %2945 = vmatprep.mubr.bf16.mxu0 %v103
    %2946 = vmatmul.mubr.bf16.gmra.mrb[0].mxu0 %v102
    %v2947 = vpop.f32.mrb[0].mxu0
    %v2948 = vadd.f32 %v2907, %v2947
    %v2949 = vpop.f32.mrb[0].mxu0
    %v2950 = vadd.f32 %v2909, %v2949
    %v2951 = vpop.f32.mrb[0].mxu0
    %v2952 = vpop.f32.mrb[0].mxu0
    %2953 = vdwg.mxu0
    %2954 = vmatprep.subr.bf16.mxu0 %v2104
    %2955 = vmatpush1.bf16.msra.mxu0 %v2103
    %2956 = vmatprep.subr.bf16.mxu0 0
    %2957 = vmatpush1.bf16.msra.mxu0 0
    %2958 = vmatprep.subr.bf16.mxu0 0
    %2959 = vmatpush1.bf16.msra.mxu0 0
    %2960 = vmatprep.subr.bf16.mxu0 0
    %2961 = vmatpush1.bf16.msra.mxu0 0
    %2962 = vmatprep.subr.bf16.mxu0 0
    %2963 = vmatpush1.bf16.msra.mxu0 0
    %2964 = vmatprep.subr.bf16.mxu0 0
    %2965 = vmatpush1.bf16.msra.mxu0 0
    %2966 = vmatprep.subr.bf16.mxu0 0
    %2967 = vmatpush1.bf16.msra.mxu0 0
    %2968 = vmatprep.subr.bf16.mxu0 0
    %2969 = vmatpush1.bf16.msra.mxu0 0
    %2970 = vmatprep.subr.bf16.mxu0 0
    %2971 = vmatpush1.bf16.msra.mxu0 0
    %2972 = vmatprep.subr.bf16.mxu0 0
    %2973 = vmatpush1.bf16.msra.mxu0 0
    %2974 = vmatprep.subr.bf16.mxu0 0
    %2975 = vmatpush1.bf16.msra.mxu0 0
    %2976 = vmatprep.subr.bf16.mxu0 0
    %2977 = vmatpush1.bf16.msra.mxu0 0
    %2978 = vmatprep.subr.bf16.mxu0 0
    %2979 = vmatpush1.bf16.msra.mxu0 0
    %2980 = vmatprep.subr.bf16.mxu0 0
    %2981 = vmatpush1.bf16.msra.mxu0 0
    %2982 = vmatprep.subr.bf16.mxu0 0
    %2983 = vmatpush1.bf16.msra.mxu0 0
    %2984 = vmatprep.subr.bf16.mxu0 0
    %2985 = vmatpush1.bf16.msra.mxu0 0
    %2986 = vmatprep.mubr.bf16.mxu0 0
    %2987 = vmatmul.mubr.bf16.gmra.mrb[0].mxu0 %v2501
    %v2988 = vpop.f32.mrb[0].mxu0
    %v2989 = vadd.f32 %v2948, %v2988
    %v2990 = vpop.f32.mrb[0].mxu0
    %v2991 = vadd.f32 %v2950, %v2990
    %v2992 = vpop.f32.mrb[0].mxu0
    %v2993 = vpop.f32.mrb[0].mxu0
    %2994 = vdwg.mxu0
    %2995 = vmatprep.subr.bf16.mxu0 %v1722
    %2996 = vmatpush1.bf16.msra.mxu0 %v1721
    %2997 = vmatprep.subr.bf16.mxu0 %v1730
    %2998 = vmatpush1.bf16.msra.mxu0 %v1729
    %2999 = vmatprep.subr.bf16.mxu0 %v1738
    %3000 = vmatpush1.bf16.msra.mxu0 %v1737
    %3001 = vmatprep.subr.bf16.mxu0 %v1746
    %3002 = vmatpush1.bf16.msra.mxu0 %v1745
    %3003 = vmatprep.subr.bf16.mxu0 %v1754
    %3004 = vmatpush1.bf16.msra.mxu0 %v1753
    %3005 = vmatprep.subr.bf16.mxu0 %v1762
    %3006 = vmatpush1.bf16.msra.mxu0 %v1761
    %3007 = vmatprep.subr.bf16.mxu0 %v1770
    %3008 = vmatpush1.bf16.msra.mxu0 %v1769
    %3009 = vmatprep.subr.bf16.mxu0 %v1778
    %3010 = vmatpush1.bf16.msra.mxu0 %v1777
    %3011 = vmatprep.subr.bf16.mxu0 %v1786
    %3012 = vmatpush1.bf16.msra.mxu0 %v1785
    %3013 = vmatprep.subr.bf16.mxu0 %v1794
    %3014 = vmatpush1.bf16.msra.mxu0 %v1793
    %3015 = vmatprep.subr.bf16.mxu0 %v1802
    %3016 = vmatpush1.bf16.msra.mxu0 %v1801
    %3017 = vmatprep.subr.bf16.mxu0 %v1810
    %3018 = vmatpush1.bf16.msra.mxu0 %v1809
    %3019 = vmatprep.subr.bf16.mxu0 %v1818
    %3020 = vmatpush1.bf16.msra.mxu0 %v1817
    %3021 = vmatprep.subr.bf16.mxu0 %v1826
    %3022 = vmatpush1.bf16.msra.mxu0 %v1825
    %3023 = vmatprep.subr.bf16.mxu0 %v1834
    %3024 = vmatpush1.bf16.msra.mxu0 %v1833
    %3025 = vmatprep.subr.bf16.mxu0 %v1842
    %3026 = vmatpush1.bf16.msra.mxu0 %v1841
    %3027 = vmatprep.mubr.bf16.mxu0 %v99
    %3028 = vmatmul.mubr.bf16.gmra.mrb[0].mxu0 %v98
    %v3029 = vpop.f32.mrb[0].mxu0
    %v3030 = vadd.f32 %v526, %v3029
    %v3031 = vpop.f32.mrb[0].mxu0
    %v3032 = vadd.f32 %v530, %v3031
    %v3033 = vpop.f32.mrb[0].mxu0
    %v3034 = vpop.f32.mrb[0].mxu0
    %3035 = vdwg.mxu0
    %3036 = vmatprep.subr.bf16.mxu0 %v1850
    %3037 = vmatpush1.bf16.msra.mxu0 %v1849
    %3038 = vmatprep.subr.bf16.mxu0 %v1858
    %3039 = vmatpush1.bf16.msra.mxu0 %v1857
    %3040 = vmatprep.subr.bf16.mxu0 %v1866
    %3041 = vmatpush1.bf16.msra.mxu0 %v1865
    %3042 = vmatprep.subr.bf16.mxu0 %v1874
    %3043 = vmatpush1.bf16.msra.mxu0 %v1873
    %3044 = vmatprep.subr.bf16.mxu0 %v1882
    %3045 = vmatpush1.bf16.msra.mxu0 %v1881
    %3046 = vmatprep.subr.bf16.mxu0 %v1890
    %3047 = vmatpush1.bf16.msra.mxu0 %v1889
    %3048 = vmatprep.subr.bf16.mxu0 %v1898
    %3049 = vmatpush1.bf16.msra.mxu0 %v1897
    %3050 = vmatprep.subr.bf16.mxu0 %v1906
    %3051 = vmatpush1.bf16.msra.mxu0 %v1905
    %3052 = vmatprep.subr.bf16.mxu0 %v1914
    %3053 = vmatpush1.bf16.msra.mxu0 %v1913
    %3054 = vmatprep.subr.bf16.mxu0 %v1922
    %3055 = vmatpush1.bf16.msra.mxu0 %v1921
    %3056 = vmatprep.subr.bf16.mxu0 %v1930
    %3057 = vmatpush1.bf16.msra.mxu0 %v1929
    %3058 = vmatprep.subr.bf16.mxu0 %v1938
    %3059 = vmatpush1.bf16.msra.mxu0 %v1937
    %3060 = vmatprep.subr.bf16.mxu0 %v1946
    %3061 = vmatpush1.bf16.msra.mxu0 %v1945
    %3062 = vmatprep.subr.bf16.mxu0 %v1954
    %3063 = vmatpush1.bf16.msra.mxu0 %v1953
    %3064 = vmatprep.subr.bf16.mxu0 %v1962
    %3065 = vmatpush1.bf16.msra.mxu0 %v1961
    %3066 = vmatprep.subr.bf16.mxu0 %v1970
    %3067 = vmatpush1.bf16.msra.mxu0 %v1969
    %3068 = vmatprep.mubr.bf16.mxu0 %v101
    %3069 = vmatmul.mubr.bf16.gmra.mrb[0].mxu0 %v100
    %v3070 = vpop.f32.mrb[0].mxu0
    %v3071 = vadd.f32 %v3030, %v3070
    %v3072 = vpop.f32.mrb[0].mxu0
    %v3073 = vadd.f32 %v3032, %v3072
    %v3074 = vpop.f32.mrb[0].mxu0
    %v3075 = vpop.f32.mrb[0].mxu0
    %3076 = vdwg.mxu0
    %3077 = vmatprep.subr.bf16.mxu0 %v1978
    %3078 = vmatpush1.bf16.msra.mxu0 %v1977
    %3079 = vmatprep.subr.bf16.mxu0 %v1986
    %3080 = vmatpush1.bf16.msra.mxu0 %v1985
    %3081 = vmatprep.subr.bf16.mxu0 %v1994
    %3082 = vmatpush1.bf16.msra.mxu0 %v1993
    %3083 = vmatprep.subr.bf16.mxu0 %v2002
    %3084 = vmatpush1.bf16.msra.mxu0 %v2001
    %3085 = vmatprep.subr.bf16.mxu0 %v2010
    %3086 = vmatpush1.bf16.msra.mxu0 %v2009
    %3087 = vmatprep.subr.bf16.mxu0 %v2018
    %3088 = vmatpush1.bf16.msra.mxu0 %v2017
    %3089 = vmatprep.subr.bf16.mxu0 %v2026
    %3090 = vmatpush1.bf16.msra.mxu0 %v2025
    %3091 = vmatprep.subr.bf16.mxu0 %v2034
    %3092 = vmatpush1.bf16.msra.mxu0 %v2033
    %3093 = vmatprep.subr.bf16.mxu0 %v2042
    %3094 = vmatpush1.bf16.msra.mxu0 %v2041
    %3095 = vmatprep.subr.bf16.mxu0 %v2050
    %3096 = vmatpush1.bf16.msra.mxu0 %v2049
    %3097 = vmatprep.subr.bf16.mxu0 %v2058
    %3098 = vmatpush1.bf16.msra.mxu0 %v2057
    %3099 = vmatprep.subr.bf16.mxu0 %v2066
    %3100 = vmatpush1.bf16.msra.mxu0 %v2065
    %3101 = vmatprep.subr.bf16.mxu0 %v2074
    %3102 = vmatpush1.bf16.msra.mxu0 %v2073
    %3103 = vmatprep.subr.bf16.mxu0 %v2082
    %3104 = vmatpush1.bf16.msra.mxu0 %v2081
    %3105 = vmatprep.subr.bf16.mxu0 %v2090
    %3106 = vmatpush1.bf16.msra.mxu0 %v2089
    %3107 = vmatprep.subr.bf16.mxu0 %v2098
    %3108 = vmatpush1.bf16.msra.mxu0 %v2097
    %3109 = vmatprep.mubr.bf16.mxu0 %v103
    %3110 = vmatmul.mubr.bf16.gmra.mrb[0].mxu0 %v102
    %v3111 = vpop.f32.mrb[0].mxu0
    %v3112 = vadd.f32 %v3071, %v3111
    %v3113 = vpop.f32.mrb[0].mxu0
    %v3114 = vadd.f32 %v3073, %v3113
    %v3115 = vpop.f32.mrb[0].mxu0
    %v3116 = vpop.f32.mrb[0].mxu0
    %3117 = vdwg.mxu0
    %3118 = vmatprep.subr.bf16.mxu0 %v2106
    %3119 = vmatpush1.bf16.msra.mxu0 %v2105
    %3120 = vmatprep.subr.bf16.mxu0 0
    %3121 = vmatpush1.bf16.msra.mxu0 0
    %3122 = vmatprep.subr.bf16.mxu0 0
    %3123 = vmatpush1.bf16.msra.mxu0 0
    %3124 = vmatprep.subr.bf16.mxu0 0
    %3125 = vmatpush1.bf16.msra.mxu0 0
    %3126 = vmatprep.subr.bf16.mxu0 0
    %3127 = vmatpush1.bf16.msra.mxu0 0
    %3128 = vmatprep.subr.bf16.mxu0 0
    %3129 = vmatpush1.bf16.msra.mxu0 0
    %3130 = vmatprep.subr.bf16.mxu0 0
    %3131 = vmatpush1.bf16.msra.mxu0 0
    %3132 = vmatprep.subr.bf16.mxu0 0
    %3133 = vmatpush1.bf16.msra.mxu0 0
    %3134 = vmatprep.subr.bf16.mxu0 0
    %3135 = vmatpush1.bf16.msra.mxu0 0
    %3136 = vmatprep.subr.bf16.mxu0 0
    %3137 = vmatpush1.bf16.msra.mxu0 0
    %3138 = vmatprep.subr.bf16.mxu0 0
    %3139 = vmatpush1.bf16.msra.mxu0 0
    %3140 = vmatprep.subr.bf16.mxu0 0
    %3141 = vmatpush1.bf16.msra.mxu0 0
    %3142 = vmatprep.subr.bf16.mxu0 0
    %3143 = vmatpush1.bf16.msra.mxu0 0
    %3144 = vmatprep.subr.bf16.mxu0 0
    %3145 = vmatpush1.bf16.msra.mxu0 0
    %3146 = vmatprep.subr.bf16.mxu0 0
    %3147 = vmatpush1.bf16.msra.mxu0 0
    %3148 = vmatprep.subr.bf16.mxu0 0
    %3149 = vmatpush1.bf16.msra.mxu0 0
    %3150 = vmatprep.mubr.bf16.mxu0 0
    %3151 = vmatmul.mubr.bf16.gmra.mrb[0].mxu0 %v2501
    %v3152 = vpop.f32.mrb[0].mxu0
    %v3153 = vadd.f32 %v3112, %v3152
    %v3154 = vpop.f32.mrb[0].mxu0
    %v3155 = vadd.f32 %v3114, %v3154
    %v3156 = vpop.f32.mrb[0].mxu0
    %v3157 = vpop.f32.mrb[0].mxu0
    %3158 = vdwg.mxu0
    %v3159 = vmax.f32 %v2661, 0.0
    %v3160 = vmax.f32 %v2663, 0.0
    %v3161 = vmax.f32 %v2825, 0.0
    %v3162 = vmax.f32 %v2827, 0.0
    %v3163 = vmax.f32 %v2989, 0.0
    %v3164 = vmax.f32 %v2991, 0.0
    %v3165 = vmax.f32 %v3153, 0.0
    %v3166 = vmax.f32 %v3155, 0.0
    %v3167 = vld [vmem:[%s1] sm:$0xff]
    %v3168 = vlaneseq
    %v3169 = vand.u32 %v3168, 127
    %3170 = vset.pattern.permute.xlu0 0
    %3171 = vperm.xlu0 %3170, %v3167
    %v3172 = vpop.permute.xlu0 %3171
    %vm3173 = vcmp.eq.s32.totalorder %v3172, %v3169
    %v3174 = vsel %vm3173, 1, 0
    %v3175 = vcvt.s32.f32 %v3174
    %v3176 = vld [vmem:[#allocation9] sm:$0xff]
    %v3177 = vld [vmem:[#allocation9 + $0x8] sm:$0xff]
    %v3178 = vld [vmem:[#allocation9 + $0x10] sm:$0xff]
    %v3179 = vld [vmem:[#allocation9 + $0x18] sm:$0xff]
    %v3180 = vld [vmem:[#allocation9 + $0x20] sm:$0xff]
    %v3181 = vld [vmem:[#allocation9 + $0x28] sm:$0xff]
    %v3182 = vld [vmem:[#allocation9 + $0x30] sm:$0xff]
    %v3183 = vld [vmem:[#allocation9 + $0x38] sm:$0xff]
    %v3184 = vld [vmem:[#allocation9 + $0x40] sm:$0x3]
    %v3185 = vld [vmem:[#allocation9 + $0x48] sm:$0x3]
    %v3186 = vld [vmem:[#allocation9 + $0x50] sm:$0x3]
    %v3187 = vld [vmem:[#allocation9 + $0x58] sm:$0x3]
    %v3188 = vld [vmem:[#allocation9 + $0x60] sm:$0x3]
    %v3189 = vld [vmem:[#allocation9 + $0x68] sm:$0x3]
    %v3190 = vld [vmem:[#allocation9 + $0x70] sm:$0x3]
    %v3191 = vld [vmem:[#allocation9 + $0x78] sm:$0x3]
    %vm3192 = vcmask 80896
    %v3194 = vsel %vm3192, %v3175, 0
    %vm3196 = vcmask 1041408
    %v3198 = vsel %vm3196, %v3184, 0
    %v3201 = vsel %vm3196, %v3185, 0
    %v3204 = vsel %vm3196, %v3186, 0
    %v3207 = vsel %vm3196, %v3187, 0
    %v3210 = vsel %vm3196, %v3188, 0
    %v3213 = vsel %vm3196, %v3189, 0
    %v3216 = vsel %vm3196, %v3190, 0
    %v3219 = vsel %vm3196, %v3191, 0
    %3221 = vmatprep.subr.mxu0 %v3177
    %3222 = vmatpush1.msra.mxu0 %v3176
    %3223 = vmatprep.subr.mxu0 %v3201
    %3224 = vmatpush1.msra.mxu0 %v3198
    %3225 = vmatprep.subr.mxu0 0.0
    %3226 = vmatpush1.msra.mxu0 0.0
    %3227 = vmatprep.subr.mxu0 0.0
    %3228 = vmatpush1.msra.mxu0 0.0
    %3229 = vmatprep.subr.mxu0 0.0
    %3230 = vmatpush1.msra.mxu0 0.0
    %3231 = vmatprep.subr.mxu0 0.0
    %3232 = vmatpush1.msra.mxu0 0.0
    %3233 = vmatprep.subr.mxu0 0.0
    %3234 = vmatpush1.msra.mxu0 0.0
    %3235 = vmatprep.subr.mxu0 0.0
    %3236 = vmatpush1.msra.mxu0 0.0
    %3237 = vmatprep.subr.mxu0 0.0
    %3238 = vmatpush1.msra.mxu0 0.0
    %3239 = vmatprep.subr.mxu0 0.0
    %3240 = vmatpush1.msra.mxu0 0.0
    %3241 = vmatprep.subr.mxu0 0.0
    %3242 = vmatpush1.msra.mxu0 0.0
    %3243 = vmatprep.subr.mxu0 0.0
    %3244 = vmatpush1.msra.mxu0 0.0
    %3245 = vmatprep.subr.mxu0 0.0
    %3246 = vmatpush1.msra.mxu0 0.0
    %3247 = vmatprep.subr.mxu0 0.0
    %3248 = vmatpush1.msra.mxu0 0.0
    %3249 = vmatprep.subr.mxu0 0.0
    %3250 = vmatpush1.msra.mxu0 0.0
    %3251 = vmatprep.subr.mxu0 0.0
    %3252 = vmatpush1.msra.mxu0 0.0
    %3253 = vmatprep.subr.mxu0 0.0
    %3254 = vmatpush1.msra.mxu0 0.0
    %3255 = vmatprep.subr.mxu0 0.0
    %3256 = vmatpush1.msra.mxu0 0.0
    %3257 = vmatprep.subr.mxu0 0.0
    %3258 = vmatpush1.msra.mxu0 0.0
    %3259 = vmatprep.subr.mxu0 0.0
    %3260 = vmatpush1.msra.mxu0 0.0
    %3261 = vmatprep.subr.mxu0 0.0
    %3262 = vmatpush1.msra.mxu0 0.0
    %3263 = vmatprep.subr.mxu0 0.0
    %3264 = vmatpush1.msra.mxu0 0.0
    %3265 = vmatprep.subr.mxu0 0.0
    %3266 = vmatpush1.msra.mxu0 0.0
    %3267 = vmatprep.subr.mxu0 0.0
    %3268 = vmatpush1.msra.mxu0 0.0
    %3269 = vmatprep.subr.mxu0 0.0
    %3270 = vmatpush1.msra.mxu0 0.0
    %3271 = vmatprep.subr.mxu0 0.0
    %3272 = vmatpush1.msra.mxu0 0.0
    %3273 = vmatprep.subr.mxu0 0.0
    %3274 = vmatpush1.msra.mxu0 0.0
    %3275 = vmatprep.subr.mxu0 0.0
    %3276 = vmatpush1.msra.mxu0 0.0
    %3277 = vmatprep.subr.mxu0 0.0
    %3278 = vmatpush1.msra.mxu0 0.0
    %3279 = vmatprep.subr.mxu0 0.0
    %3280 = vmatpush1.msra.mxu0 0.0
    %3281 = vmatprep.subr.mxu0 0.0
    %3282 = vmatpush1.msra.mxu0 0.0
    %3283 = vmatprep.subr.mxu0 0.0
    %3284 = vmatpush1.msra.mxu0 0.0
    %3285 = vmatprep.mubr.f32.mxu0 0.0
    %3286 = vmatmul.mubr.f32.gmra.mrb[0].mxu0 %v3194
    %v3287 = vpop.f32.mrb[0].mxu0
    %v3288 = vadd.f32 0.0, %v3287
    %v3289 = vpop.f32.mrb[0].mxu0
    %v3290 = vadd.f32 0.0, %v3289
    %3291 = vdwg.mxu0
    %3292 = vmatprep.subr.mxu0 %v3179
    %3293 = vmatpush1.msra.mxu0 %v3178
    %3294 = vmatprep.subr.mxu0 %v3207
    %3295 = vmatpush1.msra.mxu0 %v3204
    %3296 = vmatprep.subr.mxu0 0.0
    %3297 = vmatpush1.msra.mxu0 0.0
    %3298 = vmatprep.subr.mxu0 0.0
    %3299 = vmatpush1.msra.mxu0 0.0
    %3300 = vmatprep.subr.mxu0 0.0
    %3301 = vmatpush1.msra.mxu0 0.0
    %3302 = vmatprep.subr.mxu0 0.0
    %3303 = vmatpush1.msra.mxu0 0.0
    %3304 = vmatprep.subr.mxu0 0.0
    %3305 = vmatpush1.msra.mxu0 0.0
    %3306 = vmatprep.subr.mxu0 0.0
    %3307 = vmatpush1.msra.mxu0 0.0
    %3308 = vmatprep.subr.mxu0 0.0
    %3309 = vmatpush1.msra.mxu0 0.0
    %3310 = vmatprep.subr.mxu0 0.0
    %3311 = vmatpush1.msra.mxu0 0.0
    %3312 = vmatprep.subr.mxu0 0.0
    %3313 = vmatpush1.msra.mxu0 0.0
    %3314 = vmatprep.subr.mxu0 0.0
    %3315 = vmatpush1.msra.mxu0 0.0
    %3316 = vmatprep.subr.mxu0 0.0
    %3317 = vmatpush1.msra.mxu0 0.0
    %3318 = vmatprep.subr.mxu0 0.0
    %3319 = vmatpush1.msra.mxu0 0.0
    %3320 = vmatprep.subr.mxu0 0.0
    %3321 = vmatpush1.msra.mxu0 0.0
    %3322 = vmatprep.subr.mxu0 0.0
    %3323 = vmatpush1.msra.mxu0 0.0
    %3324 = vmatprep.subr.mxu0 0.0
    %3325 = vmatpush1.msra.mxu0 0.0
    %3326 = vmatprep.subr.mxu0 0.0
    %3327 = vmatpush1.msra.mxu0 0.0
    %3328 = vmatprep.subr.mxu0 0.0
    %3329 = vmatpush1.msra.mxu0 0.0
    %3330 = vmatprep.subr.mxu0 0.0
    %3331 = vmatpush1.msra.mxu0 0.0
    %3332 = vmatprep.subr.mxu0 0.0
    %3333 = vmatpush1.msra.mxu0 0.0
    %3334 = vmatprep.subr.mxu0 0.0
    %3335 = vmatpush1.msra.mxu0 0.0
    %3336 = vmatprep.subr.mxu0 0.0
    %3337 = vmatpush1.msra.mxu0 0.0
    %3338 = vmatprep.subr.mxu0 0.0
    %3339 = vmatpush1.msra.mxu0 0.0
    %3340 = vmatprep.subr.mxu0 0.0
    %3341 = vmatpush1.msra.mxu0 0.0
    %3342 = vmatprep.subr.mxu0 0.0
    %3343 = vmatpush1.msra.mxu0 0.0
    %3344 = vmatprep.subr.mxu0 0.0
    %3345 = vmatpush1.msra.mxu0 0.0
    %3346 = vmatprep.subr.mxu0 0.0
    %3347 = vmatpush1.msra.mxu0 0.0
    %3348 = vmatprep.subr.mxu0 0.0
    %3349 = vmatpush1.msra.mxu0 0.0
    %3350 = vmatprep.subr.mxu0 0.0
    %3351 = vmatpush1.msra.mxu0 0.0
    %3352 = vmatprep.subr.mxu0 0.0
    %3353 = vmatpush1.msra.mxu0 0.0
    %3354 = vmatprep.subr.mxu0 0.0
    %3355 = vmatpush1.msra.mxu0 0.0
    %3356 = vmatprep.mubr.f32.mxu0 0.0
    %3357 = vmatmul.mubr.f32.gmra.mrb[0].mxu0 %v3194
    %v3358 = vpop.f32.mrb[0].mxu0
    %v3359 = vadd.f32 0.0, %v3358
    %v3360 = vpop.f32.mrb[0].mxu0
    %v3361 = vadd.f32 0.0, %v3360
    %3362 = vdwg.mxu0
    %3363 = vmatprep.subr.mxu0 %v3181
    %3364 = vmatpush1.msra.mxu0 %v3180
    %3365 = vmatprep.subr.mxu0 %v3213
    %3366 = vmatpush1.msra.mxu0 %v3210
    %3367 = vmatprep.subr.mxu0 0.0
    %3368 = vmatpush1.msra.mxu0 0.0
    %3369 = vmatprep.subr.mxu0 0.0
    %3370 = vmatpush1.msra.mxu0 0.0
    %3371 = vmatprep.subr.mxu0 0.0
    %3372 = vmatpush1.msra.mxu0 0.0
    %3373 = vmatprep.subr.mxu0 0.0
    %3374 = vmatpush1.msra.mxu0 0.0
    %3375 = vmatprep.subr.mxu0 0.0
    %3376 = vmatpush1.msra.mxu0 0.0
    %3377 = vmatprep.subr.mxu0 0.0
    %3378 = vmatpush1.msra.mxu0 0.0
    %3379 = vmatprep.subr.mxu0 0.0
    %3380 = vmatpush1.msra.mxu0 0.0
    %3381 = vmatprep.subr.mxu0 0.0
    %3382 = vmatpush1.msra.mxu0 0.0
    %3383 = vmatprep.subr.mxu0 0.0
    %3384 = vmatpush1.msra.mxu0 0.0
    %3385 = vmatprep.subr.mxu0 0.0
    %3386 = vmatpush1.msra.mxu0 0.0
    %3387 = vmatprep.subr.mxu0 0.0
    %3388 = vmatpush1.msra.mxu0 0.0
    %3389 = vmatprep.subr.mxu0 0.0
    %3390 = vmatpush1.msra.mxu0 0.0
    %3391 = vmatprep.subr.mxu0 0.0
    %3392 = vmatpush1.msra.mxu0 0.0
    %3393 = vmatprep.subr.mxu0 0.0
    %3394 = vmatpush1.msra.mxu0 0.0
    %3395 = vmatprep.subr.mxu0 0.0
    %3396 = vmatpush1.msra.mxu0 0.0
    %3397 = vmatprep.subr.mxu0 0.0
    %3398 = vmatpush1.msra.mxu0 0.0
    %3399 = vmatprep.subr.mxu0 0.0
    %3400 = vmatpush1.msra.mxu0 0.0
    %3401 = vmatprep.subr.mxu0 0.0
    %3402 = vmatpush1.msra.mxu0 0.0
    %3403 = vmatprep.subr.mxu0 0.0
    %3404 = vmatpush1.msra.mxu0 0.0
    %3405 = vmatprep.subr.mxu0 0.0
    %3406 = vmatpush1.msra.mxu0 0.0
    %3407 = vmatprep.subr.mxu0 0.0
    %3408 = vmatpush1.msra.mxu0 0.0
    %3409 = vmatprep.subr.mxu0 0.0
    %3410 = vmatpush1.msra.mxu0 0.0
    %3411 = vmatprep.subr.mxu0 0.0
    %3412 = vmatpush1.msra.mxu0 0.0
    %3413 = vmatprep.subr.mxu0 0.0
    %3414 = vmatpush1.msra.mxu0 0.0
    %3415 = vmatprep.subr.mxu0 0.0
    %3416 = vmatpush1.msra.mxu0 0.0
    %3417 = vmatprep.subr.mxu0 0.0
    %3418 = vmatpush1.msra.mxu0 0.0
    %3419 = vmatprep.subr.mxu0 0.0
    %3420 = vmatpush1.msra.mxu0 0.0
    %3421 = vmatprep.subr.mxu0 0.0
    %3422 = vmatpush1.msra.mxu0 0.0
    %3423 = vmatprep.subr.mxu0 0.0
    %3424 = vmatpush1.msra.mxu0 0.0
    %3425 = vmatprep.subr.mxu0 0.0
    %3426 = vmatpush1.msra.mxu0 0.0
    %3427 = vmatprep.mubr.f32.mxu0 0.0
    %3428 = vmatmul.mubr.f32.gmra.mrb[0].mxu0 %v3194
    %v3429 = vpop.f32.mrb[0].mxu0
    %v3430 = vadd.f32 0.0, %v3429
    %v3431 = vpop.f32.mrb[0].mxu0
    %v3432 = vadd.f32 0.0, %v3431
    %3433 = vdwg.mxu0
    %3434 = vmatprep.subr.mxu0 %v3183
    %3435 = vmatpush1.msra.mxu0 %v3182
    %3436 = vmatprep.subr.mxu0 %v3219
    %3437 = vmatpush1.msra.mxu0 %v3216
    %3438 = vmatprep.subr.mxu0 0.0
    %3439 = vmatpush1.msra.mxu0 0.0
    %3440 = vmatprep.subr.mxu0 0.0
    %3441 = vmatpush1.msra.mxu0 0.0
    %3442 = vmatprep.subr.mxu0 0.0
    %3443 = vmatpush1.msra.mxu0 0.0
    %3444 = vmatprep.subr.mxu0 0.0
    %3445 = vmatpush1.msra.mxu0 0.0
    %3446 = vmatprep.subr.mxu0 0.0
    %3447 = vmatpush1.msra.mxu0 0.0
    %3448 = vmatprep.subr.mxu0 0.0
    %3449 = vmatpush1.msra.mxu0 0.0
    %3450 = vmatprep.subr.mxu0 0.0
    %3451 = vmatpush1.msra.mxu0 0.0
    %3452 = vmatprep.subr.mxu0 0.0
    %3453 = vmatpush1.msra.mxu0 0.0
    %3454 = vmatprep.subr.mxu0 0.0
    %3455 = vmatpush1.msra.mxu0 0.0
    %3456 = vmatprep.subr.mxu0 0.0
    %3457 = vmatpush1.msra.mxu0 0.0
    %3458 = vmatprep.subr.mxu0 0.0
    %3459 = vmatpush1.msra.mxu0 0.0
    %3460 = vmatprep.subr.mxu0 0.0
    %3461 = vmatpush1.msra.mxu0 0.0
    %3462 = vmatprep.subr.mxu0 0.0
    %3463 = vmatpush1.msra.mxu0 0.0
    %3464 = vmatprep.subr.mxu0 0.0
    %3465 = vmatpush1.msra.mxu0 0.0
    %3466 = vmatprep.subr.mxu0 0.0
    %3467 = vmatpush1.msra.mxu0 0.0
    %3468 = vmatprep.subr.mxu0 0.0
    %3469 = vmatpush1.msra.mxu0 0.0
    %3470 = vmatprep.subr.mxu0 0.0
    %3471 = vmatpush1.msra.mxu0 0.0
    %3472 = vmatprep.subr.mxu0 0.0
    %3473 = vmatpush1.msra.mxu0 0.0
    %3474 = vmatprep.subr.mxu0 0.0
    %3475 = vmatpush1.msra.mxu0 0.0
    %3476 = vmatprep.subr.mxu0 0.0
    %3477 = vmatpush1.msra.mxu0 0.0
    %3478 = vmatprep.subr.mxu0 0.0
    %3479 = vmatpush1.msra.mxu0 0.0
    %3480 = vmatprep.subr.mxu0 0.0
    %3481 = vmatpush1.msra.mxu0 0.0
    %3482 = vmatprep.subr.mxu0 0.0
    %3483 = vmatpush1.msra.mxu0 0.0
    %3484 = vmatprep.subr.mxu0 0.0
    %3485 = vmatpush1.msra.mxu0 0.0
    %3486 = vmatprep.subr.mxu0 0.0
    %3487 = vmatpush1.msra.mxu0 0.0
    %3488 = vmatprep.subr.mxu0 0.0
    %3489 = vmatpush1.msra.mxu0 0.0
    %3490 = vmatprep.subr.mxu0 0.0
    %3491 = vmatpush1.msra.mxu0 0.0
    %3492 = vmatprep.subr.mxu0 0.0
    %3493 = vmatpush1.msra.mxu0 0.0
    %3494 = vmatprep.subr.mxu0 0.0
    %3495 = vmatpush1.msra.mxu0 0.0
    %3496 = vmatprep.subr.mxu0 0.0
    %3497 = vmatpush1.msra.mxu0 0.0
    %3498 = vmatprep.mubr.f32.mxu0 0.0
    %3499 = vmatmul.mubr.f32.gmra.mrb[0].mxu0 %v3194
    %v3500 = vpop.f32.mrb[0].mxu0
    %v3501 = vadd.f32 0.0, %v3500
    %v3502 = vpop.f32.mrb[0].mxu0
    %v3503 = vadd.f32 0.0, %v3502
    %3504 = vdwg.mxu0
    %v3505 = vmul.f32 %v3159, %v3288
    %v3506 = vmul.f32 %v3160, %v3290
    %v3507 = vmul.f32 %v3161, %v3359
    %v3508 = vmul.f32 %v3162, %v3361
    %v3509 = vmul.f32 %v3163, %v3430
    %v3510 = vmul.f32 %v3164, %v3432
    %v3511 = vmul.f32 %v3165, %v3501
    %v3512 = vmul.f32 %v3166, %v3503
    %v3513 = vld [vmem:[#allocation11] sm:$0xff]
    %v3515 = vlaneseq
    %v3516 = vshrl.u32 %v3515, 7
    %v3517 = vsub.s32 0, %v3516
    %v3518 = vrot.slane %v3513, %v3517
    %v3519 = vlaneseq
    %v3520 = vshrl.u32 %v3519, 7
    %v3521 = vsub.s32 1, %v3520
    %v3522 = vrot.slane %v3513, %v3521
    %v3523 = vlaneseq
    %v3524 = vshrl.u32 %v3523, 7
    %v3525 = vsub.s32 2, %v3524
    %v3526 = vrot.slane %v3513, %v3525
    %v3527 = vlaneseq
    %v3528 = vshrl.u32 %v3527, 7
    %v3529 = vsub.s32 3, %v3528
    %v3530 = vrot.slane %v3513, %v3529
    %v3531 = vlaneseq
    %v3532 = vshrl.u32 %v3531, 7
    %v3533 = vsub.s32 4, %v3532
    %v3534 = vrot.slane %v3513, %v3533
    %v3535 = vlaneseq
    %v3536 = vshrl.u32 %v3535, 7
    %v3537 = vsub.s32 5, %v3536
    %v3538 = vrot.slane %v3513, %v3537
    %v3539 = vlaneseq
    %v3540 = vshrl.u32 %v3539, 7
    %v3541 = vsub.s32 6, %v3540
    %v3542 = vrot.slane %v3513, %v3541
    %v3543 = vlaneseq
    %v3544 = vshrl.u32 %v3543, 7
    %v3545 = vsub.s32 7, %v3544
    %v3546 = vrot.slane %v3513, %v3545
    %v3555 = vmul.f32 %v3505, %v3518
    %v3556 = vmul.f32 %v3506, %v3522
    %v3557 = vmul.f32 %v3507, %v3526
    %v3558 = vmul.f32 %v3508, %v3530
    %v3559 = vmul.f32 %v3509, %v3534
    %v3560 = vmul.f32 %v3510, %v3538
    %v3561 = vmul.f32 %v3511, %v3542
    %v3562 = vmul.f32 %v3512, %v3546
    %v3563 = vadd.f32 %v3555, %v3556
    %v3564 = vadd.f32 %v3563, %v3557
    %v3565 = vadd.f32 %v3564, %v3558
    %v3566 = vadd.f32 %v3565, %v3559
    %v3567 = vadd.f32 %v3566, %v3560
    %v3568 = vadd.f32 %v3567, %v3561
    %v3569 = vadd.f32 %v3568, %v3562
    %3570 = vadd.xlane.f32.xlu0 %v3569
    %v3571 = vpop.xlane.xlu0 %3570
    %3572 = vxpose.xlu0.b32.start [1/16] %v3571, 128
    %3573 = vxpose.xlu0.b32.cont [2/16] 0.0, 128
    %3574 = vxpose.xlu0.b32.cont [3/16] 0.0, 128
    %3575 = vxpose.xlu0.b32.cont [4/16] 0.0, 128
    %3576 = vxpose.xlu0.b32.cont [5/16] 0.0, 128
    %3577 = vxpose.xlu0.b32.cont [6/16] 0.0, 128
    %3578 = vxpose.xlu0.b32.cont [7/16] 0.0, 128
    %3579 = vxpose.xlu0.b32.cont [8/16] 0.0, 128
    %3580 = vxpose.xlu0.b32.cont [9/16] 0.0, 128
    %3581 = vxpose.xlu0.b32.cont [10/16] 0.0, 128
    %3582 = vxpose.xlu0.b32.cont [11/16] 0.0, 128
    %3583 = vxpose.xlu0.b32.cont [12/16] 0.0, 128
    %3584 = vxpose.xlu0.b32.cont [13/16] 0.0, 128
    %3585 = vxpose.xlu0.b32.cont [14/16] 0.0, 128
    %3586 = vxpose.xlu0.b32.cont [15/16] 0.0, 128
    %3587 = vxpose.xlu0.b32.end [16/16] 0.0, 128
    %v3588 = vpop.trf.xlu0
    %v3589 = vpop.trf.xlu0
    %v3590 = vpop.trf.xlu0
    %v3591 = vpop.trf.xlu0
    %v3592 = vpop.trf.xlu0
    %v3593 = vpop.trf.xlu0
    %v3594 = vpop.trf.xlu0
    %v3595 = vpop.trf.xlu0
    %v3596 = vpop.trf.xlu0
    %v3597 = vpop.trf.xlu0
    %v3598 = vpop.trf.xlu0
    %v3599 = vpop.trf.xlu0
    %v3600 = vpop.trf.xlu0
    %v3601 = vpop.trf.xlu0
    %v3602 = vpop.trf.xlu0
    %v3603 = vpop.trf.xlu0
    %s3604 = sld [smem:[#allocation2]]
    %v3605 = vstv %s3604
    %v3606 = vadd.f32 %v3588, %v3605
    %vm3607 = vcmask 57344
    %3608 = vst.msk [vmem:[#allocation12] sm:$0x1] %vm3607, %v3606
    // Predicated region
    $region50: #{tpu_custom_call.1} parent=1 // pred_check
      _
    $region51: #{tpu_custom_call.1} parent=1 // pred_check_branch
      %3610 = sbr.rel (0) target = $region53
    $region52: #{tpu_custom_call.1} parent=1 // pred_region
      %s3612 = ssub.s32 16, 16
      %3613 = vsyncadd [#allocation5], %s3612
      %s3615 = sshll.u32 [#allocation12], 4
      %s3616 = int_to_ptr.vmem [resolvable:$true] %s3615
      %3618 = dma.vmem_to_hbm [thread:$0]  %s3616, 16, %s7, [#allocation5]
    $region53: #{tpu_custom_call.1} parent=1 // pred_fallthru
      _
    // Predicated region
    $region54: #{tpu_custom_call.1} parent=1 // pred_check
      _
    $region55: #{tpu_custom_call.1} parent=1 // pred_check_branch
      %3620 = sbr.rel (0) target = $region57
    $region56: #{tpu_custom_call.1} parent=1 // pred_region
      %3621 = dma.done [#allocation5], 16
    $region57: #{tpu_custom_call.1} parent=1 // pred_fallthru
      _
    %3622 = vsyncpa [#allocation4], 1
    %3623 = vsyncpa [#allocation7], 1
    %3624 = vsyncpa [#allocation10], 1
    %3625 = vsyncpa [#allocation5], 1

</llo_original>
